<compile_context>
chip_gen: v7x
topology: tpu7x:2x2x1
jax: 0.10.0
libtpu: 0.0.40
codegen_flags: <defaults>
</compile_context>

<pallas_src>
import functools

import jax
import jax.numpy as jnp
from jax.experimental import pallas as pl
from jax.experimental.pallas import tpu as pltpu


def _round_up(x, m):
    return ((x + m - 1) // m) * m


# ----------------------------------------------------------------------------
# Pallas kernels
# ----------------------------------------------------------------------------
def _mm_bias_kernel(x_ref, w_ref, b_ref, o_ref, *, apply_relu):
    """o = maybe_relu(x @ w + bias); BN scale already folded into w columns."""
    acc = jnp.dot(x_ref[...], w_ref[...], preferred_element_type=jnp.float32)
    acc = acc + b_ref[...]
    if apply_relu:
        acc = jnp.maximum(acc, 0.0)
    o_ref[...] = acc.astype(o_ref.dtype)


def _fc_stack_kernel(x_ref, w1_ref, b1_ref, w2_ref, b2_ref, w3_ref, b3_ref,
                     o_ref):
    """Fused fc -> relu -> fc1 -> relu -> fc2 (intermediates stay on-chip)."""
    h = jnp.dot(x_ref[...], w1_ref[...],
                preferred_element_type=jnp.float32) + b1_ref[...]
    h = jnp.maximum(h, 0.0)
    h = jnp.dot(h, w2_ref[...],
                preferred_element_type=jnp.float32) + b2_ref[...]
    h = jnp.maximum(h, 0.0)
    h = jnp.dot(h, w3_ref[...],
                preferred_element_type=jnp.float32) + b3_ref[...]
    o_ref[...] = h.astype(o_ref.dtype)


# ----------------------------------------------------------------------------
# Kernel wrappers
# ----------------------------------------------------------------------------
def matmul_bias_act(x, w, bias, *, apply_relu, m_tile=512,
                    dot_dtype=jnp.float32):
    """Tiled, pipelined (x @ w) + bias [+ relu] with lane-dense (128) padding.

    K and N are zero-padded to multiples of 128; M is zero-padded to a
    multiple of the M tile.  Padding is sliced off before returning.
    """
    M, K = x.shape
    K2, N = w.shape
    assert K == K2
    Kp = _round_up(K, 128)
    Np = _round_up(N, 128)
    mt = min(m_tile, _round_up(M, 8))
    Mp = _round_up(M, mt)

    x_p = jnp.zeros((Mp, Kp), dot_dtype).at[:M, :K].set(x.astype(dot_dtype))
    w_p = jnp.zeros((Kp, Np), dot_dtype).at[:K, :N].set(w.astype(dot_dtype))
    b_p = jnp.zeros((1, Np), jnp.float32).at[0, :N].set(
        bias.astype(jnp.float32))

    out = pl.pallas_call(
        functools.partial(_mm_bias_kernel, apply_relu=apply_relu),
        out_shape=jax.ShapeDtypeStruct((Mp, Np), jnp.float32),
        grid=(Mp // mt,),
        in_specs=[
            pl.BlockSpec((mt, Kp), lambda i: (i, 0)),   # M-tiled activations
            pl.BlockSpec((Kp, Np), lambda i: (0, 0)),   # weights (resident)
            pl.BlockSpec((1, Np), lambda i: (0, 0)),    # folded bias
        ],
        out_specs=pl.BlockSpec((mt, Np), lambda i: (i, 0)),
        compiler_params=pltpu.CompilerParams(
            dimension_semantics=("parallel",)),
    )(x_p, w_p, b_p)
    return out[:M, :N]


def fc_stack(x, params, num_classes, *, m_tile=256):
    """Fused FC stack: one pallas_call for fc -> relu -> fc1 -> relu1 -> fc2."""
    M, K = x.shape                       # (B, 400)
    H1, H2 = 120, 84
    Kp = _round_up(K, 128)               # 512
    H1p = _round_up(H1, 128)             # 128
    H2p = _round_up(H2, 128)             # 128
    Np = _round_up(num_classes, 128)     # 128
    mt = min(m_tile, _round_up(M, 8))
    Mp = _round_up(M, mt)

    f32 = jnp.float32
    x_p = jnp.zeros((Mp, Kp), f32).at[:M, :K].set(x.astype(f32))
    w1_p = jnp.zeros((Kp, H1p), f32).at[:K, :H1].set(params['fcw'].T)
    b1_p = jnp.zeros((1, H1p), f32).at[0, :H1].set(params['fcb'])
    w2_p = jnp.zeros((H1p, H2p), f32).at[:H1, :H2].set(params['fc1w'].T)
    b2_p = jnp.zeros((1, H2p), f32).at[0, :H2].set(params['fc1b'])
    w3_p = jnp.zeros((H2p, Np), f32).at[:H2, :num_classes].set(params['fc2w'].T)
    b3_p = jnp.zeros((1, Np), f32).at[0, :num_classes].set(params['fc2b'])

    out = pl.pallas_call(
        _fc_stack_kernel,
        out_shape=jax.ShapeDtypeStruct((Mp, Np), jnp.float32),
        grid=(Mp // mt,),
        in_specs=[
            pl.BlockSpec((mt, Kp), lambda i: (i, 0)),
            pl.BlockSpec((Kp, H1p), lambda i: (0, 0)),
            pl.BlockSpec((1, H1p), lambda i: (0, 0)),
            pl.BlockSpec((H1p, H2p), lambda i: (0, 0)),
            pl.BlockSpec((1, H2p), lambda i: (0, 0)),
            pl.BlockSpec((H2p, Np), lambda i: (0, 0)),
            pl.BlockSpec((1, Np), lambda i: (0, 0)),
        ],
        out_specs=pl.BlockSpec((mt, Np), lambda i: (i, 0)),
        compiler_params=pltpu.CompilerParams(
            dimension_semantics=("parallel",)),
    )(x_p, w1_p, b1_p, w2_p, b2_p, w3_p, b3_p)
    return out[:M, :num_classes]


# ----------------------------------------------------------------------------
# LeNet building blocks (glue in JAX, compute in the kernels above)
# ----------------------------------------------------------------------------
def _im2col(x_nhwc, kh, kw):
    B, H, W, C = x_nhwc.shape
    Ho, Wo = H - kh + 1, W - kw + 1
    cols = []
    for i in range(kh):
        for j in range(kw):
            cols.append(x_nhwc[:, i:i + Ho, j:j + Wo, :])
    p = jnp.stack(cols, axis=3)                 # (B, Ho, Wo, kh*kw, C)
    return p.reshape(B * Ho * Wo, kh * kw * C), (B, Ho, Wo)


def _avgpool_2x2(y_nhwc):
    """AvgPool2d(kernel=2, stride=2); trivial reshape+mean left to XLA."""
    B, H, W, C = y_nhwc.shape
    return y_nhwc.reshape(B, H // 2, 2, W // 2, 2, C).mean(axis=(2, 4))


def conv_bn_relu_pool(x_nhwc, w_oihw, b, gamma, beta, rmean, rvar, *,
                      padding, eps=1e-5):
    cout, cin, kh, kw = w_oihw.shape
    if padding:
        x_nhwc = jnp.pad(
            x_nhwc, ((0, 0), (padding, padding), (padding, padding), (0, 0)))
    patches, (B, Ho, Wo) = _im2col(x_nhwc, kh, kw)
    # weight matrix ordered (ki, kj, cin) -> cout, matching the im2col ordering
    w_mat = jnp.transpose(w_oihw, (2, 3, 1, 0)).reshape(kh * kw * cin, cout)
    # fold conv bias + eval-mode BatchNorm: scale goes into the weight columns
    inv = gamma / jnp.sqrt(rvar + eps)
    w_mat = w_mat * inv[None, :]
    bias = beta + inv * (b - rmean)
    y = matmul_bias_act(patches, w_mat, bias, apply_relu=True,
                        m_tile=512, dot_dtype=jnp.bfloat16)
    y = y.reshape(B, Ho, Wo, cout)
    return _avgpool_2x2(y)


def lenet_forward(params, x_nchw):
    num_classes = params['fc2w'].shape[0]
    x = jnp.transpose(x_nchw, (0, 2, 3, 1))            # NCHW -> NHWC
    x = conv_bn_relu_pool(x, params['w1'], params['b1'],
                          params['g1'], params['be1'], params['m1'],
                          params['v1'], padding=2)      # (B, 14, 14, 6)
    x = conv_bn_relu_pool(x, params['w2'], params['b2'],
                          params['g2'], params['be2'], params['m2'],
                          params['v2'], padding=0)      # (B, 5, 5, 16)
    B = x.shape[0]
    # flatten in NCHW order to match torch's out.view(B, -1)
    x = jnp.transpose(x, (0, 3, 1, 2)).reshape(B, -1)   # (B, 400)
    return fc_stack(x, params, num_classes)             # fused fc/relu stack


# ----------------------------------------------------------------------------
# Deterministic parameter initialization (shapes from the nn.Module __init__)
# ----------------------------------------------------------------------------
def init_params(key, num_classes):
    ks = jax.random.split(key, 10)

    def rnd(k, shape, scale=0.1):
        return jax.random.normal(k, shape, jnp.float32) * scale

    p = {}
    # layer1: Conv2d(1, 6, 5, padding=2) + BatchNorm2d(6)
    p['w1'] = rnd(ks[0], (6, 1, 5, 5))
    p['b1'] = rnd(ks[1], (6,))
    p['g1'] = jnp.ones((6,), jnp.float32)
    p['be1'] = jnp.zeros((6,), jnp.float32)
    p['m1'] = jnp.zeros((6,), jnp.float32)
    p['v1'] = jnp.ones((6,), jnp.float32)
    # layer2: Conv2d(6, 16, 5, padding=0) + BatchNorm2d(16)
    p['w2'] = rnd(ks[2], (16, 6, 5, 5))
    p['b2'] = rnd(ks[3], (16,))
    p['g2'] = jnp.ones((16,), jnp.float32)
    p['be2'] = jnp.zeros((16,), jnp.float32)
    p['m2'] = jnp.zeros((16,), jnp.float32)
    p['v2'] = jnp.ones((16,), jnp.float32)
    # fc stack
    p['fcw'] = rnd(ks[4], (120, 16 * 5 * 5))
    p['fcb'] = rnd(ks[5], (120,))
    p['fc1w'] = rnd(ks[6], (84, 120))
    p['fc1b'] = rnd(ks[7], (84,))
    p['fc2w'] = rnd(ks[8], (num_classes, 84))
    p['fc2b'] = rnd(ks[9], (num_classes,))
    return p


if __name__ == "__main__":
    num_classes = 10
    batch = 2

    key = jax.random.PRNGKey(0)
    k_params, k_x = jax.random.split(key)
    params = init_params(k_params, num_classes)
    # LeNet geometry requires 28x28 single-channel input (16*5*5 flatten)
    x = jax.random.normal(k_x, (batch, 1, 28, 28), jnp.float32)

    fwd = jax.jit(lenet_forward)
    out = fwd(params, x)
    out = jax.block_until_ready(out)

    assert out.shape == (batch, num_classes), out.shape
    assert bool(jnp.all(jnp.isfinite(out)))
    print("KERNEL_OK")
</pallas_src>

<mosaic_0001>
module attributes {stable_mosaic.version = 11 : i64} {
  func.func @_mm_bias_kernel(%arg0: i32, %arg1: memref<512x128xbf16, #tpu.memory_space<vmem>>, %arg2: memref<128x128xbf16, #tpu.memory_space<vmem>>, %arg3: memref<1x128xf32, #tpu.memory_space<vmem>>, %arg4: memref<512x128xf32, #tpu.memory_space<vmem>>) attributes {dimension_semantics = [#tpu.dimension_semantics<parallel>], iteration_bounds = array<i64: 4>, scalar_prefetch = 0 : i64, scratch_operands = 0 : i64, tpu.core_type = #tpu.core_type<tc>, window_params = [{transform_indices = @transform_0, window_bounds = array<i64: 512, 128>}, {pipeline_mode = #tpu.pipeline_mode<synchronous>, transform_indices = @transform_1, window_bounds = array<i64: 128, 128>}, {pipeline_mode = #tpu.pipeline_mode<synchronous>, transform_indices = @transform_2, window_bounds = array<i64: 1, 128>}, {transform_indices = @transform_3, window_bounds = array<i64: 512, 128>}]} {
    %c0 = arith.constant 0 : index
    %c0_0 = arith.constant 0 : index
    %0 = vector.load %arg1[%c0, %c0_0] : memref<512x128xbf16, #tpu.memory_space<vmem>>, vector<512x128xbf16>
    %c0_1 = arith.constant 0 : index
    %c0_2 = arith.constant 0 : index
    %1 = vector.load %arg2[%c0_1, %c0_2] : memref<128x128xbf16, #tpu.memory_space<vmem>>, vector<128x128xbf16>
    %cst = arith.constant dense<0.000000e+00> : vector<512x128xf32>
    %2 = tpu.matmul %0, %1, %cst {dimension_numbers = #tpu.dot_dimension_numbers<[1], [0], [0], [1], [0, 0, 1, 1], [], []>} : vector<512x128xbf16>, vector<128x128xbf16>, vector<512x128xf32> -> vector<512x128xf32>
    %c0_3 = arith.constant 0 : index
    %c0_4 = arith.constant 0 : index
    %3 = vector.load %arg3[%c0_3, %c0_4] : memref<1x128xf32, #tpu.memory_space<vmem>>, vector<1x128xf32>
    %4 = vector.broadcast %3 : vector<1x128xf32> to vector<512x128xf32>
    %5 = arith.addf %2, %4 : vector<512x128xf32>
    %cst_5 = arith.constant 0.000000e+00 : f32
    %6 = vector.broadcast %cst_5 : f32 to vector<512x128xf32>
    %7 = arith.maximumf %5, %6 : vector<512x128xf32>
    %c0_6 = arith.constant 0 : index
    %c0_7 = arith.constant 0 : index
    %8 = vector.load %arg4[%c0_6, %c0_7] : memref<512x128xf32, #tpu.memory_space<vmem>>, vector<512x128xf32>
    tpu.vector_store %arg4[%c0_6, %c0_7], %7 {strides = array<i32>} : memref<512x128xf32, #tpu.memory_space<vmem>>, vector<512x128xf32>,
    return
  }
  func.func @transform_0(%arg0: i32) -> (i32, i32) {
    %c0_i32 = arith.constant 0 : i32
    %c0_i32_0 = arith.constant 0 : i32
    return %arg0, %c0_i32 : i32, i32
  }
  func.func @transform_1(%arg0: i32) -> (i32, i32) {
    %c0_i32 = arith.constant 0 : i32
    %c0_i32_0 = arith.constant 0 : i32
    %c0_i32_1 = arith.constant 0 : i32
    return %c0_i32, %c0_i32_0 : i32, i32
  }
  func.func @transform_2(%arg0: i32) -> (i32, i32) {
    %c0_i32 = arith.constant 0 : i32
    %c0_i32_0 = arith.constant 0 : i32
    %c0_i32_1 = arith.constant 0 : i32
    return %c0_i32, %c0_i32_0 : i32, i32
  }
  func.func @transform_3(%arg0: i32) -> (i32, i32) {
    %c0_i32 = arith.constant 0 : i32
    %c0_i32_0 = arith.constant 0 : i32
    return %arg0, %c0_i32 : i32, i32
  }
}

module attributes {stable_mosaic.version = 11 : i64} {
  func.func @_mm_bias_kernel(%arg0: i32, %arg1: memref<200x256xbf16, #tpu.memory_space<vmem>>, %arg2: memref<256x128xbf16, #tpu.memory_space<vmem>>, %arg3: memref<1x128xf32, #tpu.memory_space<vmem>>, %arg4: memref<200x128xf32, #tpu.memory_space<vmem>>) attributes {dimension_semantics = [#tpu.dimension_semantics<parallel>], iteration_bounds = array<i64: 1>, scalar_prefetch = 0 : i64, scratch_operands = 0 : i64, tpu.core_type = #tpu.core_type<tc>, window_params = [{transform_indices = @transform_0, window_bounds = array<i64: 200, 256>}, {pipeline_mode = #tpu.pipeline_mode<synchronous>, transform_indices = @transform_1, window_bounds = array<i64: 256, 128>}, {pipeline_mode = #tpu.pipeline_mode<synchronous>, transform_indices = @transform_2, window_bounds = array<i64: 1, 128>}, {transform_indices = @transform_3, window_bounds = array<i64: 200, 128>}]} {
    %c0 = arith.constant 0 : index
    %c0_0 = arith.constant 0 : index
    %0 = vector.load %arg1[%c0, %c0_0] : memref<200x256xbf16, #tpu.memory_space<vmem>>, vector<200x256xbf16>
    %c0_1 = arith.constant 0 : index
    %c0_2 = arith.constant 0 : index
    %1 = vector.load %arg2[%c0_1, %c0_2] : memref<256x128xbf16, #tpu.memory_space<vmem>>, vector<256x128xbf16>
    %cst = arith.constant dense<0.000000e+00> : vector<200x128xf32>
    %2 = tpu.matmul %0, %1, %cst {dimension_numbers = #tpu.dot_dimension_numbers<[1], [0], [0], [1], [0, 0, 1, 1], [], []>} : vector<200x256xbf16>, vector<256x128xbf16>, vector<200x128xf32> -> vector<200x128xf32>
    %c0_3 = arith.constant 0 : index
    %c0_4 = arith.constant 0 : index
    %3 = vector.load %arg3[%c0_3, %c0_4] : memref<1x128xf32, #tpu.memory_space<vmem>>, vector<1x128xf32>
    %4 = vector.broadcast %3 : vector<1x128xf32> to vector<200x128xf32>
    %5 = arith.addf %2, %4 : vector<200x128xf32>
    %cst_5 = arith.constant 0.000000e+00 : f32
    %6 = vector.broadcast %cst_5 : f32 to vector<200x128xf32>
    %7 = arith.maximumf %5, %6 : vector<200x128xf32>
    %c0_6 = arith.constant 0 : index
    %c0_7 = arith.constant 0 : index
    %8 = vector.load %arg4[%c0_6, %c0_7] : memref<200x128xf32, #tpu.memory_space<vmem>>, vector<200x128xf32>
    tpu.vector_store %arg4[%c0_6, %c0_7], %7 {strides = array<i32>} : memref<200x128xf32, #tpu.memory_space<vmem>>, vector<200x128xf32>,
    return
  }
  func.func @transform_0(%arg0: i32) -> (i32, i32) {
    %c0_i32 = arith.constant 0 : i32
    %c0_i32_0 = arith.constant 0 : i32
    return %arg0, %c0_i32 : i32, i32
  }
  func.func @transform_1(%arg0: i32) -> (i32, i32) {
    %c0_i32 = arith.constant 0 : i32
    %c0_i32_0 = arith.constant 0 : i32
    %c0_i32_1 = arith.constant 0 : i32
    return %c0_i32, %c0_i32_0 : i32, i32
  }
  func.func @transform_2(%arg0: i32) -> (i32, i32) {
    %c0_i32 = arith.constant 0 : i32
    %c0_i32_0 = arith.constant 0 : i32
    %c0_i32_1 = arith.constant 0 : i32
    return %c0_i32, %c0_i32_0 : i32, i32
  }
  func.func @transform_3(%arg0: i32) -> (i32, i32) {
    %c0_i32 = arith.constant 0 : i32
    %c0_i32_0 = arith.constant 0 : i32
    return %arg0, %c0_i32 : i32, i32
  }
}

module attributes {stable_mosaic.version = 11 : i64} {
  func.func @_fc_stack_kernel(%arg0: i32, %arg1: memref<8x512xf32, #tpu.memory_space<vmem>>, %arg2: memref<512x128xf32, #tpu.memory_space<vmem>>, %arg3: memref<1x128xf32, #tpu.memory_space<vmem>>, %arg4: memref<128x128xf32, #tpu.memory_space<vmem>>, %arg5: memref<1x128xf32, #tpu.memory_space<vmem>>, %arg6: memref<128x128xf32, #tpu.memory_space<vmem>>, %arg7: memref<1x128xf32, #tpu.memory_space<vmem>>, %arg8: memref<8x128xf32, #tpu.memory_space<vmem>>) attributes {dimension_semantics = [#tpu.dimension_semantics<parallel>], iteration_bounds = array<i64: 1>, scalar_prefetch = 0 : i64, scratch_operands = 0 : i64, tpu.core_type = #tpu.core_type<tc>, window_params = [{transform_indices = @transform_0, window_bounds = array<i64: 8, 512>}, {pipeline_mode = #tpu.pipeline_mode<synchronous>, transform_indices = @transform_1, window_bounds = array<i64: 512, 128>}, {pipeline_mode = #tpu.pipeline_mode<synchronous>, transform_indices = @transform_2, window_bounds = array<i64: 1, 128>}, {pipeline_mode = #tpu.pipeline_mode<synchronous>, transform_indices = @transform_3, window_bounds = array<i64: 128, 128>}, {pipeline_mode = #tpu.pipeline_mode<synchronous>, transform_indices = @transform_4, window_bounds = array<i64: 1, 128>}, {pipeline_mode = #tpu.pipeline_mode<synchronous>, transform_indices = @transform_5, window_bounds = array<i64: 128, 128>}, {pipeline_mode = #tpu.pipeline_mode<synchronous>, transform_indices = @transform_6, window_bounds = array<i64: 1, 128>}, {transform_indices = @transform_7, window_bounds = array<i64: 8, 128>}]} {
    %c0 = arith.constant 0 : index
    %c0_0 = arith.constant 0 : index
    %0 = vector.load %arg1[%c0, %c0_0] : memref<8x512xf32, #tpu.memory_space<vmem>>, vector<8x512xf32>
    %c0_1 = arith.constant 0 : index
    %c0_2 = arith.constant 0 : index
    %1 = vector.load %arg2[%c0_1, %c0_2] : memref<512x128xf32, #tpu.memory_space<vmem>>, vector<512x128xf32>
    %cst = arith.constant dense<0.000000e+00> : vector<8x128xf32>
    %2 = tpu.matmul %0, %1, %cst {dimension_numbers = #tpu.dot_dimension_numbers<[1], [0], [0], [1], [0, 0, 1, 1], [], []>} : vector<8x512xf32>, vector<512x128xf32>, vector<8x128xf32> -> vector<8x128xf32>
    %c0_3 = arith.constant 0 : index
    %c0_4 = arith.constant 0 : index
    %3 = vector.load %arg3[%c0_3, %c0_4] : memref<1x128xf32, #tpu.memory_space<vmem>>, vector<1x128xf32>
    %4 = vector.broadcast %3 : vector<1x128xf32> to vector<8x128xf32>
    %5 = arith.addf %2, %4 : vector<8x128xf32>
    %cst_5 = arith.constant 0.000000e+00 : f32
    %6 = vector.broadcast %cst_5 : f32 to vector<8x128xf32>
    %7 = arith.maximumf %5, %6 : vector<8x128xf32>
    %c0_6 = arith.constant 0 : index
    %c0_7 = arith.constant 0 : index
    %8 = vector.load %arg4[%c0_6, %c0_7] : memref<128x128xf32, #tpu.memory_space<vmem>>, vector<128x128xf32>
    %cst_8 = arith.constant dense<0.000000e+00> : vector<8x128xf32>
    %9 = tpu.matmul %7, %8, %cst_8 {dimension_numbers = #tpu.dot_dimension_numbers<[1], [0], [0], [1], [0, 0, 1, 1], [], []>} : vector<8x128xf32>, vector<128x128xf32>, vector<8x128xf32> -> vector<8x128xf32>
    %c0_9 = arith.constant 0 : index
    %c0_10 = arith.constant 0 : index
    %10 = vector.load %arg5[%c0_9, %c0_10] : memref<1x128xf32, #tpu.memory_space<vmem>>, vector<1x128xf32>
    %11 = vector.broadcast %10 : vector<1x128xf32> to vector<8x128xf32>
    %12 = arith.addf %9, %11 : vector<8x128xf32>
    %cst_11 = arith.constant 0.000000e+00 : f32
    %13 = vector.broadcast %cst_11 : f32 to vector<8x128xf32>
    %14 = arith.maximumf %12, %13 : vector<8x128xf32>
    %c0_12 = arith.constant 0 : index
    %c0_13 = arith.constant 0 : index
    %15 = vector.load %arg6[%c0_12, %c0_13] : memref<128x128xf32, #tpu.memory_space<vmem>>, vector<128x128xf32>
    %cst_14 = arith.constant dense<0.000000e+00> : vector<8x128xf32>
    %16 = tpu.matmul %14, %15, %cst_14 {dimension_numbers = #tpu.dot_dimension_numbers<[1], [0], [0], [1], [0, 0, 1, 1], [], []>} : vector<8x128xf32>, vector<128x128xf32>, vector<8x128xf32> -> vector<8x128xf32>
    %c0_15 = arith.constant 0 : index
    %c0_16 = arith.constant 0 : index
    %17 = vector.load %arg7[%c0_15, %c0_16] : memref<1x128xf32, #tpu.memory_space<vmem>>, vector<1x128xf32>
    %18 = vector.broadcast %17 : vector<1x128xf32> to vector<8x128xf32>
    %19 = arith.addf %16, %18 : vector<8x128xf32>
    %c0_17 = arith.constant 0 : index
    %c0_18 = arith.constant 0 : index
    %20 = vector.load %arg8[%c0_17, %c0_18] : memref<8x128xf32, #tpu.memory_space<vmem>>, vector<8x128xf32>
    tpu.vector_store %arg8[%c0_17, %c0_18], %19 {strides = array<i32>} : memref<8x128xf32, #tpu.memory_space<vmem>>, vector<8x128xf32>,
    return
  }
  func.func @transform_0(%arg0: i32) -> (i32, i32) {
    %c0_i32 = arith.constant 0 : i32
    %c0_i32_0 = arith.constant 0 : i32
    return %arg0, %c0_i32 : i32, i32
  }
  func.func @transform_1(%arg0: i32) -> (i32, i32) {
    %c0_i32 = arith.constant 0 : i32
    %c0_i32_0 = arith.constant 0 : i32
    %c0_i32_1 = arith.constant 0 : i32
    return %c0_i32, %c0_i32_0 : i32, i32
  }
  func.func @transform_2(%arg0: i32) -> (i32, i32) {
    %c0_i32 = arith.constant 0 : i32
    %c0_i32_0 = arith.constant 0 : i32
    %c0_i32_1 = arith.constant 0 : i32
    return %c0_i32, %c0_i32_0 : i32, i32
  }
  func.func @transform_3(%arg0: i32) -> (i32, i32) {
    %c0_i32 = arith.constant 0 : i32
    %c0_i32_0 = arith.constant 0 : i32
    %c0_i32_1 = arith.constant 0 : i32
    return %c0_i32, %c0_i32_0 : i32, i32
  }
  func.func @transform_4(%arg0: i32) -> (i32, i32) {
    %c0_i32 = arith.constant 0 : i32
    %c0_i32_0 = arith.constant 0 : i32
    %c0_i32_1 = arith.constant 0 : i32
    return %c0_i32, %c0_i32_0 : i32, i32
  }
  func.func @transform_5(%arg0: i32) -> (i32, i32) {
    %c0_i32 = arith.constant 0 : i32
    %c0_i32_0 = arith.constant 0 : i32
    %c0_i32_1 = arith.constant 0 : i32
    return %c0_i32, %c0_i32_0 : i32, i32
  }
  func.func @transform_6(%arg0: i32) -> (i32, i32) {
    %c0_i32 = arith.constant 0 : i32
    %c0_i32_0 = arith.constant 0 : i32
    %c0_i32_1 = arith.constant 0 : i32
    return %c0_i32, %c0_i32_0 : i32, i32
  }
  func.func @transform_7(%arg0: i32) -> (i32, i32) {
    %c0_i32 = arith.constant 0 : i32
    %c0_i32_0 = arith.constant 0 : i32
    return %arg0, %c0_i32 : i32, i32
  }
}

</mosaic_0001>

<llo_original>
// kernel: lenet_forward.3
$region0: #{lenet_forward.3}
  #allocation0 [shape = 'u32[]', space=smem, size = 0x4, offset = 0x4, fixed_abs, tag = 'smem constant byte address 0x4 - core index']
  #allocation1 [shape = 'u32[144,128]{1,0:T(1,128)}', space=vmem, size = 0x12000, scoped, tag = 'internal scratch']
  %s0 = inlined_call_operand.vmem [shape: bf16[2048,128], index: 0, kind: input, shape index: {}]
  %s1 = inlined_call_operand.vmem [shape: bf16[128,128], index: 1, kind: input, shape index: {}]
  %s2 = inlined_call_operand.vmem [shape: f32[1,128], index: 2, kind: input, shape index: {}]
  %s3 = inlined_call_operand.vmem [shape: f32[2048,128], index: 3, kind: output, shape index: {}]
  %s4 = sld [smem:[#allocation0]]
  $region45: #{lenet_forward.3} parent=0
    _
  %s6 = ssub.s32 1, %s4
  %s7 = scalar_select 0, %s6, %s4
  loop: start=0, step=1, limit=6
  $region2: #{lenet_forward.3} parent=0 // loop_pre_header
    _
  $region3: #{lenet_forward.3} parent=0 // loop_header
    %s9 = sphi 0, %s13
    %p10 = scmp.ge.s32.totalorder %s9, 6
    %s19 = sphi 0, %s21
    %s22 = sphi 0, %s19
    %s23 = sphi 0, %s22
    %s39 = sphi 0, %s23
    %s43 = sphi 0, %s43
    %s45 = sphi 0, %s43
    %s46 = sphi 0, %s45
    %s60 = sphi 0, %s46
    %s64 = sphi 0, %s64
    %s66 = sphi 0, %s64
    %s67 = sphi 0, %s66
    %s81 = sphi 0, %s67
    %s87 = sphi 0, %s89
    %s90 = sphi 0, %s87
    %s91 = sphi 0, %s90
    %s107 = sphi 0, %s91
  $region4: #{lenet_forward.3} parent=0 // loop_header_branch
    %12 = sbr.rel (%p10) target = $region8
  $region5: #{lenet_forward.3} parent=0 // loop_body
    %s14 = ssub.s32 %s9, 1
    %s15 = ssub.s32 %s9, 2
    %s16 = sadd.s32 %s9, 1
    %s17 = ssub.s32 %s9, %s16
    %p18 = scmp.eq.s32.totalorder %s17, 0
    %s20 = sadd.s32 %s19, 1
    %s21 = scalar_select %p18, %s19, %s20
    %p24 = pneg %p18
    %p25 = scmp.eq.s32.totalorder %s9, 3
    %p26 = por %p24, %p25
    %p27 = scmp.ne.s32.totalorder %s19, %s22
    %p28 = scmp.eq.s32.totalorder %s9, 0
    %p29 = por %p27, %p28
    %p30 = scmp.ne.s32.totalorder %s19, %s22
    %p31 = scmp.eq.s32.totalorder %s14, 3
    %p32 = por %p30, %p31
    %p33 = scmp.ne.s32.totalorder %s22, %s23
    %p34 = scmp.eq.s32.totalorder %s14, 0
    %p35 = por %p33, %p34
    %p36 = scmp.ne.s32.totalorder %s22, %s23
    %p37 = scmp.eq.s32.totalorder %s15, 3
    %p38 = por %p36, %p37
    %p40 = scmp.ne.s32.totalorder %s23, %s39
    %p41 = scmp.eq.s32.totalorder %s15, 0
    %p42 = por %p40, %p41
    %s44 = sadd.s32 %s43, 1
    %p47 = scmp.eq.s32.totalorder %s9, 3
    %p48 = scmp.ne.s32.totalorder %s43, %s45
    %p49 = scmp.eq.s32.totalorder %s9, 0
    %p50 = por %p48, %p49
    %p51 = scmp.ne.s32.totalorder %s43, %s45
    %p52 = scmp.eq.s32.totalorder %s14, 3
    %p53 = por %p51, %p52
    %p54 = scmp.ne.s32.totalorder %s45, %s46
    %p55 = scmp.eq.s32.totalorder %s14, 0
    %p56 = por %p54, %p55
    %p57 = scmp.ne.s32.totalorder %s45, %s46
    %p58 = scmp.eq.s32.totalorder %s15, 3
    %p59 = por %p57, %p58
    %p61 = scmp.ne.s32.totalorder %s46, %s60
    %p62 = scmp.eq.s32.totalorder %s15, 0
    %p63 = por %p61, %p62
    %s65 = sadd.s32 %s64, 1
    %p68 = scmp.eq.s32.totalorder %s9, 3
    %p69 = scmp.ne.s32.totalorder %s64, %s66
    %p70 = scmp.eq.s32.totalorder %s9, 0
    %p71 = por %p69, %p70
    %p72 = scmp.ne.s32.totalorder %s64, %s66
    %p73 = scmp.eq.s32.totalorder %s14, 3
    %p74 = por %p72, %p73
    %p75 = scmp.ne.s32.totalorder %s66, %s67
    %p76 = scmp.eq.s32.totalorder %s14, 0
    %p77 = por %p75, %p76
    %p78 = scmp.ne.s32.totalorder %s66, %s67
    %p79 = scmp.eq.s32.totalorder %s15, 3
    %p80 = por %p78, %p79
    %p82 = scmp.ne.s32.totalorder %s67, %s81
    %p83 = scmp.eq.s32.totalorder %s15, 0
    %p84 = por %p82, %p83
    %s85 = ssub.s32 %s9, %s16
    %p86 = scmp.eq.s32.totalorder %s85, 0
    %s88 = sadd.s32 %s87, 1
    %s89 = scalar_select %p86, %s87, %s88
    %p92 = pneg %p86
    %p93 = scmp.eq.s32.totalorder %s9, 3
    %p94 = por %p92, %p93
    %p95 = scmp.ne.s32.totalorder %s87, %s90
    %p96 = scmp.eq.s32.totalorder %s9, 0
    %p97 = por %p95, %p96
    %p98 = scmp.ne.s32.totalorder %s87, %s90
    %p99 = scmp.eq.s32.totalorder %s14, 3
    %p100 = por %p98, %p99
    %p101 = scmp.ne.s32.totalorder %s90, %s91
    %p102 = scmp.eq.s32.totalorder %s14, 0
    %p103 = por %p101, %p102
    %p104 = scmp.ne.s32.totalorder %s90, %s91
    %p105 = scmp.eq.s32.totalorder %s15, 3
    %p106 = por %p104, %p105
    %p108 = scmp.ne.s32.totalorder %s91, %s107
    %p109 = scmp.eq.s32.totalorder %s15, 0
    %p110 = por %p108, %p109
    %p111 = scmp.le.s32.totalorder 1, %s9
    %p112 = scmp.lt.s32.totalorder %s9, 5
    %p113 = pnand %p111, %p112
    %p114 = pneg %p113
    // Predicated region
    $region9: #{lenet_forward.3} parent=5 // pred_check
      _
    $region10: #{lenet_forward.3} parent=5 // pred_check_branch
      %116 = sbr.rel (%p113) target = $region12
    $region11: #{lenet_forward.3} parent=5 // pred_region
      %s117 = ssub.s32 %s9, 1
      // Predicated region
      $region13: #{lenet_forward.3} parent=11 // pred_check
        %p118 = pneg %p56
      $region14: #{lenet_forward.3} parent=11 // pred_check_branch
        %120 = sbr.rel (%p118) target = $region16
      $region15: #{lenet_forward.3} parent=11 // pred_region
        _
      $region16: #{lenet_forward.3} parent=11 // pred_fallthru
        _
      // Predicated region
      $region17: #{lenet_forward.3} parent=11 // pred_check
        %p121 = pneg %p77
      $region18: #{lenet_forward.3} parent=11 // pred_check_branch
        %123 = sbr.rel (%p121) target = $region20
      $region19: #{lenet_forward.3} parent=11 // pred_region
        _
      $region20: #{lenet_forward.3} parent=11 // pred_fallthru
        _
    $region12: #{lenet_forward.3} parent=5 // pred_fallthru
      _
    %p124 = scmp.lt.s32.totalorder %s9, 4
    // Predicated region
    $region21: #{lenet_forward.3} parent=5 // pred_check
      %p125 = pneg %p124
    $region22: #{lenet_forward.3} parent=5 // pred_check_branch
      %127 = sbr.rel (%p125) target = $region24
    $region23: #{lenet_forward.3} parent=5 // pred_region
      // Predicated region
      $region25: #{lenet_forward.3} parent=23 // pred_check
        %p128 = pneg %p29
      $region26: #{lenet_forward.3} parent=23 // pred_check_branch
        %130 = sbr.rel (%p128) target = $region28
      $region27: #{lenet_forward.3} parent=23 // pred_region
        %s131 = smul.u32 64, %s9
        %p132 = scmp.lt.s32.totalorder %s131, 255
        %s133 = scalar_select %p132, %s131, 255
        %s134 = smul.addr %s133, 4
        %s135 = scalar_lea.vmem %s0, %s134
        %s136 = smul.u32 64, %s9
      $region28: #{lenet_forward.3} parent=23 // pred_fallthru
        _
    $region24: #{lenet_forward.3} parent=5 // pred_fallthru
      _
    %p137 = scmp.le.s32.totalorder 1, %s9
    %p138 = scmp.lt.s32.totalorder %s9, 5
    %p139 = pnand %p137, %p138
    %p140 = pneg %p139
    // Predicated region
    $region29: #{lenet_forward.3} parent=5 // pred_check
      _
    $region30: #{lenet_forward.3} parent=5 // pred_check_branch
      %142 = sbr.rel (%p139) target = $region32
    $region31: #{lenet_forward.3} parent=5 // pred_region
      %s143 = ssub.s32 %s9, 1
      %s144 = smul.u32 64, %s14
      %p145 = scmp.lt.s32.totalorder %s144, 255
      %s146 = scalar_select %p145, %s144, 255
      %s147 = smul.addr %s146, 4
      %s148 = scalar_lea.vmem %s0, %s147
      %p149 = pneg %p35
      %p150 = pneg %p32
      %p151 = pneg %p56
      %p152 = pneg %p53
      %p153 = pneg %p77
      %p154 = pneg %p74
      %p155 = pneg %p103
      %p156 = pneg %p100
      %s157 = smul.u32 64, %s14
      %p158 = scmp.lt.s32.totalorder %s157, 255
      %s159 = scalar_select %p158, %s157, 255
      %s160 = smul.addr %s159, 8
      %s161 = scalar_lea.vmem %s3, %s160
      %s162 = smul.u32 64, %s14
      %p163 = scmp.lt.s32.totalorder %s162, 255
      %s164 = scalar_select %p163, %s162, 255
      %s165 = smul.addr %s164, 4
      %s166 = scalar_lea.vmem %s0, %s165
      %s167 = smul.u32 64, %s14
      %s168 = smul.u32 64, %s14
      %p169 = scmp.lt.s32.totalorder %s168, 255
      %s170 = scalar_select %p169, %s168, 255
      %s171 = smul.addr %s170, 8
      %s172 = scalar_lea.vmem %s3, %s171
      %s173 = smul.u32 64, %s14
      %v175 = vld [vmem:[%s166] sm:$0xf]
      %v176 = vld [vmem:[%s166 + $0x4] sm:$0xf]
      %v177 = vld [vmem:[%s166 + $0x8] sm:$0xf]
      %v178 = vld [vmem:[%s166 + $0xc] sm:$0xf]
      %v179 = vld [vmem:[%s166 + $0x10] sm:$0xf]
      %v180 = vld [vmem:[%s166 + $0x14] sm:$0xf]
      %v181 = vld [vmem:[%s166 + $0x18] sm:$0xf]
      %v182 = vld [vmem:[%s166 + $0x1c] sm:$0xf]
      %v183 = vld [vmem:[%s166 + $0x20] sm:$0xf]
      %v184 = vld [vmem:[%s166 + $0x24] sm:$0xf]
      %v185 = vld [vmem:[%s166 + $0x28] sm:$0xf]
      %v186 = vld [vmem:[%s166 + $0x2c] sm:$0xf]
      %v187 = vld [vmem:[%s166 + $0x30] sm:$0xf]
      %v188 = vld [vmem:[%s166 + $0x34] sm:$0xf]
      %v189 = vld [vmem:[%s166 + $0x38] sm:$0xf]
      %v190 = vld [vmem:[%s166 + $0x3c] sm:$0xf]
      %v191 = vld [vmem:[%s166 + $0x40] sm:$0xf]
      %v192 = vld [vmem:[%s166 + $0x44] sm:$0xf]
      %v193 = vld [vmem:[%s166 + $0x48] sm:$0xf]
      %v194 = vld [vmem:[%s166 + $0x4c] sm:$0xf]
      %v195 = vld [vmem:[%s166 + $0x50] sm:$0xf]
      %v196 = vld [vmem:[%s166 + $0x54] sm:$0xf]
      %v197 = vld [vmem:[%s166 + $0x58] sm:$0xf]
      %v198 = vld [vmem:[%s166 + $0x5c] sm:$0xf]
      %v199 = vld [vmem:[%s166 + $0x60] sm:$0xf]
      %v200 = vld [vmem:[%s166 + $0x64] sm:$0xf]
      %v201 = vld [vmem:[%s166 + $0x68] sm:$0xf]
      %v202 = vld [vmem:[%s166 + $0x6c] sm:$0xf]
      %v203 = vld [vmem:[%s166 + $0x70] sm:$0xf]
      %v204 = vld [vmem:[%s166 + $0x74] sm:$0xf]
      %v205 = vld [vmem:[%s166 + $0x78] sm:$0xf]
      %v206 = vld [vmem:[%s166 + $0x7c] sm:$0xf]
      %v207 = vld [vmem:[%s166 + $0x80] sm:$0xf]
      %v208 = vld [vmem:[%s166 + $0x84] sm:$0xf]
      %v209 = vld [vmem:[%s166 + $0x88] sm:$0xf]
      %v210 = vld [vmem:[%s166 + $0x8c] sm:$0xf]
      %v211 = vld [vmem:[%s166 + $0x90] sm:$0xf]
      %v212 = vld [vmem:[%s166 + $0x94] sm:$0xf]
      %v213 = vld [vmem:[%s166 + $0x98] sm:$0xf]
      %v214 = vld [vmem:[%s166 + $0x9c] sm:$0xf]
      %v215 = vld [vmem:[%s166 + $0xa0] sm:$0xf]
      %v216 = vld [vmem:[%s166 + $0xa4] sm:$0xf]
      %v217 = vld [vmem:[%s166 + $0xa8] sm:$0xf]
      %v218 = vld [vmem:[%s166 + $0xac] sm:$0xf]
      %v219 = vld [vmem:[%s166 + $0xb0] sm:$0xf]
      %v220 = vld [vmem:[%s166 + $0xb4] sm:$0xf]
      %v221 = vld [vmem:[%s166 + $0xb8] sm:$0xf]
      %v222 = vld [vmem:[%s166 + $0xbc] sm:$0xf]
      %v223 = vld [vmem:[%s166 + $0xc0] sm:$0xf]
      %v224 = vld [vmem:[%s166 + $0xc4] sm:$0xf]
      %v225 = vld [vmem:[%s166 + $0xc8] sm:$0xf]
      %v226 = vld [vmem:[%s166 + $0xcc] sm:$0xf]
      %v227 = vld [vmem:[%s166 + $0xd0] sm:$0xf]
      %v228 = vld [vmem:[%s166 + $0xd4] sm:$0xf]
      %v229 = vld [vmem:[%s166 + $0xd8] sm:$0xf]
      %v230 = vld [vmem:[%s166 + $0xdc] sm:$0xf]
      %v231 = vld [vmem:[%s166 + $0xe0] sm:$0xf]
      %v232 = vld [vmem:[%s166 + $0xe4] sm:$0xf]
      %v233 = vld [vmem:[%s166 + $0xe8] sm:$0xf]
      %v234 = vld [vmem:[%s166 + $0xec] sm:$0xf]
      %v235 = vld [vmem:[%s166 + $0xf0] sm:$0xf]
      %v236 = vld [vmem:[%s166 + $0xf4] sm:$0xf]
      %v237 = vld [vmem:[%s166 + $0xf8] sm:$0xf]
      %v238 = vld [vmem:[%s166 + $0xfc] sm:$0xf]
      %v239 = vld [vmem:[%s1] sm:$0xf]
      %v240 = vld [vmem:[%s1 + $0x4] sm:$0xf]
      %v241 = vld [vmem:[%s1 + $0x8] sm:$0xf]
      %v242 = vld [vmem:[%s1 + $0xc] sm:$0xf]
      %v243 = vld [vmem:[%s1 + $0x10] sm:$0xf]
      %v244 = vld [vmem:[%s1 + $0x14] sm:$0xf]
      %v245 = vld [vmem:[%s1 + $0x18] sm:$0xf]
      %v246 = vld [vmem:[%s1 + $0x1c] sm:$0xf]
      %v247 = vld [vmem:[%s1 + $0x20] sm:$0xf]
      %v248 = vld [vmem:[%s1 + $0x24] sm:$0xf]
      %v249 = vld [vmem:[%s1 + $0x28] sm:$0xf]
      %v250 = vld [vmem:[%s1 + $0x2c] sm:$0xf]
      %v251 = vld [vmem:[%s1 + $0x30] sm:$0xf]
      %v252 = vld [vmem:[%s1 + $0x34] sm:$0xf]
      %v253 = vld [vmem:[%s1 + $0x38] sm:$0xf]
      %v254 = vld [vmem:[%s1 + $0x3c] sm:$0xf]
      %v255 = vld [vmem:[%s2] sm:$0x1]
      %v257 = vlaneseq
      %v258 = vshrl.u32 %v257, 7
      %v259 = vsub.s32 0, %v258
      %v260 = vrot.slane %v255, %v259
      %v326 = vunpack.c.l.b16 %v175
      %v327 = vunpack.c.l.b16 %v176
      %v328 = vunpack.c.l.b16 %v177
      %v329 = vunpack.c.l.b16 %v178
      %v330 = vunpack.c.l.b16 %v179
      %v331 = vunpack.c.l.b16 %v180
      %v332 = vunpack.c.l.b16 %v181
      %v333 = vunpack.c.l.b16 %v182
      %v334 = vunpack.c.l.b16 %v183
      %v335 = vunpack.c.l.b16 %v184
      %v336 = vunpack.c.l.b16 %v185
      %v337 = vunpack.c.l.b16 %v186
      %v338 = vunpack.c.l.b16 %v187
      %v339 = vunpack.c.l.b16 %v188
      %v340 = vunpack.c.l.b16 %v189
      %v341 = vunpack.c.l.b16 %v190
      %v342 = vunpack.c.l.b16 %v191
      %v343 = vunpack.c.l.b16 %v192
      %v344 = vunpack.c.l.b16 %v193
      %v345 = vunpack.c.l.b16 %v194
      %v346 = vunpack.c.l.b16 %v195
      %v347 = vunpack.c.l.b16 %v196
      %v348 = vunpack.c.l.b16 %v197
      %v349 = vunpack.c.l.b16 %v198
      %v350 = vunpack.c.l.b16 %v199
      %v351 = vunpack.c.l.b16 %v200
      %v352 = vunpack.c.l.b16 %v201
      %v353 = vunpack.c.l.b16 %v202
      %v354 = vunpack.c.l.b16 %v203
      %v355 = vunpack.c.l.b16 %v204
      %v356 = vunpack.c.l.b16 %v205
      %v357 = vunpack.c.l.b16 %v206
      %v358 = vunpack.c.l.b16 %v207
      %v359 = vunpack.c.l.b16 %v208
      %v360 = vunpack.c.l.b16 %v209
      %v361 = vunpack.c.l.b16 %v210
      %v362 = vunpack.c.l.b16 %v211
      %v363 = vunpack.c.l.b16 %v212
      %v364 = vunpack.c.l.b16 %v213
      %v365 = vunpack.c.l.b16 %v214
      %v366 = vunpack.c.l.b16 %v215
      %v367 = vunpack.c.l.b16 %v216
      %v368 = vunpack.c.l.b16 %v217
      %v369 = vunpack.c.l.b16 %v218
      %v370 = vunpack.c.l.b16 %v219
      %v371 = vunpack.c.l.b16 %v220
      %v372 = vunpack.c.l.b16 %v221
      %v373 = vunpack.c.l.b16 %v222
      %v374 = vunpack.c.l.b16 %v223
      %v375 = vunpack.c.l.b16 %v224
      %v376 = vunpack.c.l.b16 %v225
      %v377 = vunpack.c.l.b16 %v226
      %v378 = vunpack.c.l.b16 %v227
      %v379 = vunpack.c.l.b16 %v228
      %v380 = vunpack.c.l.b16 %v229
      %v381 = vunpack.c.l.b16 %v230
      %v382 = vunpack.c.l.b16 %v231
      %v383 = vunpack.c.l.b16 %v232
      %v384 = vunpack.c.l.b16 %v233
      %v385 = vunpack.c.l.b16 %v234
      %v386 = vunpack.c.l.b16 %v235
      %v387 = vunpack.c.l.b16 %v236
      %v388 = vunpack.c.l.b16 %v237
      %v389 = vunpack.c.l.b16 %v238
      %v390 = vpack.c.b16 %v327, %v326
      %v391 = vpack.c.b16 %v329, %v328
      %v392 = vpack.c.b16 %v331, %v330
      %v393 = vpack.c.b16 %v333, %v332
      %v394 = vpack.c.b16 %v335, %v334
      %v395 = vpack.c.b16 %v337, %v336
      %v396 = vpack.c.b16 %v339, %v338
      %v397 = vpack.c.b16 %v341, %v340
      %v398 = vpack.c.b16 %v343, %v342
      %v399 = vpack.c.b16 %v345, %v344
      %v400 = vpack.c.b16 %v347, %v346
      %v401 = vpack.c.b16 %v349, %v348
      %v402 = vpack.c.b16 %v351, %v350
      %v403 = vpack.c.b16 %v353, %v352
      %v404 = vpack.c.b16 %v355, %v354
      %v405 = vpack.c.b16 %v357, %v356
      %v406 = vpack.c.b16 %v359, %v358
      %v407 = vpack.c.b16 %v361, %v360
      %v408 = vpack.c.b16 %v363, %v362
      %v409 = vpack.c.b16 %v365, %v364
      %v410 = vpack.c.b16 %v367, %v366
      %v411 = vpack.c.b16 %v369, %v368
      %v412 = vpack.c.b16 %v371, %v370
      %v413 = vpack.c.b16 %v373, %v372
      %v414 = vpack.c.b16 %v375, %v374
      %v415 = vpack.c.b16 %v377, %v376
      %v416 = vpack.c.b16 %v379, %v378
      %v417 = vpack.c.b16 %v381, %v380
      %v418 = vpack.c.b16 %v383, %v382
      %v419 = vpack.c.b16 %v385, %v384
      %v420 = vpack.c.b16 %v387, %v386
      %v421 = vpack.c.b16 %v389, %v388
      %v470 = vunpack.c.l.b16 %v239
      %v471 = vunpack.c.l.b16 %v240
      %v472 = vunpack.c.l.b16 %v241
      %v473 = vunpack.c.l.b16 %v242
      %v474 = vunpack.c.l.b16 %v243
      %v475 = vunpack.c.l.b16 %v244
      %v476 = vunpack.c.l.b16 %v245
      %v477 = vunpack.c.l.b16 %v246
      %v478 = vunpack.c.l.b16 %v247
      %v479 = vunpack.c.l.b16 %v248
      %v480 = vunpack.c.l.b16 %v249
      %v481 = vunpack.c.l.b16 %v250
      %v482 = vunpack.c.l.b16 %v251
      %v483 = vunpack.c.l.b16 %v252
      %v484 = vunpack.c.l.b16 %v253
      %v485 = vunpack.c.l.b16 %v254
      %v486 = vpack.c.b16 %v471, %v470
      %v487 = vpack.c.b16 %v473, %v472
      %v488 = vpack.c.b16 %v475, %v474
      %v489 = vpack.c.b16 %v477, %v476
      %v490 = vpack.c.b16 %v479, %v478
      %v491 = vpack.c.b16 %v481, %v480
      %v492 = vpack.c.b16 %v483, %v482
      %v493 = vpack.c.b16 %v485, %v484
      %502 = vmatprep.subr.bf16.mxu0 0
      %503 = vmatpush1.bf16.msra.mxu0 %v486
      %504 = vmatprep.subr.bf16.mxu0 0
      %505 = vmatpush1.bf16.msra.mxu0 %v487
      %506 = vmatprep.subr.bf16.mxu0 0
      %507 = vmatpush1.bf16.msra.mxu0 %v488
      %508 = vmatprep.subr.bf16.mxu0 0
      %509 = vmatpush1.bf16.msra.mxu0 %v489
      %510 = vmatprep.subr.bf16.mxu0 0
      %511 = vmatpush1.bf16.msra.mxu0 %v490
      %512 = vmatprep.subr.bf16.mxu0 0
      %513 = vmatpush1.bf16.msra.mxu0 %v491
      %514 = vmatprep.subr.bf16.mxu0 0
      %515 = vmatpush1.bf16.msra.mxu0 %v492
      %516 = vmatprep.subr.bf16.mxu0 0
      %517 = vmatpush1.bf16.msra.mxu0 %v493
      %518 = vmatprep.subr.bf16.mxu0 0
      %519 = vmatpush1.bf16.msra.mxu0 0
      %520 = vmatprep.subr.bf16.mxu0 0
      %521 = vmatpush1.bf16.msra.mxu0 0
      %522 = vmatprep.subr.bf16.mxu0 0
      %523 = vmatpush1.bf16.msra.mxu0 0
      %524 = vmatprep.subr.bf16.mxu0 0
      %525 = vmatpush1.bf16.msra.mxu0 0
      %526 = vmatprep.subr.bf16.mxu0 0
      %527 = vmatpush1.bf16.msra.mxu0 0
      %528 = vmatprep.subr.bf16.mxu0 0
      %529 = vmatpush1.bf16.msra.mxu0 0
      %530 = vmatprep.subr.bf16.mxu0 0
      %531 = vmatpush1.bf16.msra.mxu0 0
      %532 = vmatprep.subr.bf16.mxu0 0
      %533 = vmatpush1.bf16.msra.mxu0 0
      %534 = vmatprep.mubr.bf16.mxu0 0
      %535 = vmatmul.mubr.bf16.gmra.mrb[0].mxu0 %v390
      %v536 = vpop.f32.mrb[0].mxu0
      %v537 = vadd.f32 %v260, %v536
      %v538 = vpop.f32.mrb[0].mxu0
      %v539 = vpop.f32.mrb[0].mxu0
      %v540 = vadd.f32 %v260, %v539
      %v541 = vpop.f32.mrb[0].mxu0
      %542 = vmatprep.mubr.bf16.mxu0 0
      %543 = vmatmul.mubr.bf16.gmra.mrb[0].mxu0 %v391
      %v544 = vpop.f32.mrb[0].mxu0
      %v545 = vadd.f32 %v260, %v544
      %v546 = vpop.f32.mrb[0].mxu0
      %v547 = vpop.f32.mrb[0].mxu0
      %v548 = vadd.f32 %v260, %v547
      %v549 = vpop.f32.mrb[0].mxu0
      %550 = vmatprep.mubr.bf16.mxu0 0
      %551 = vmatmul.mubr.bf16.gmra.mrb[0].mxu0 %v392
      %v552 = vpop.f32.mrb[0].mxu0
      %v553 = vadd.f32 %v260, %v552
      %v554 = vpop.f32.mrb[0].mxu0
      %v555 = vpop.f32.mrb[0].mxu0
      %v556 = vadd.f32 %v260, %v555
      %v557 = vpop.f32.mrb[0].mxu0
      %558 = vmatprep.mubr.bf16.mxu0 0
      %559 = vmatmul.mubr.bf16.gmra.mrb[0].mxu0 %v393
      %v560 = vpop.f32.mrb[0].mxu0
      %v561 = vadd.f32 %v260, %v560
      %v562 = vpop.f32.mrb[0].mxu0
      %v563 = vpop.f32.mrb[0].mxu0
      %v564 = vadd.f32 %v260, %v563
      %v565 = vpop.f32.mrb[0].mxu0
      %566 = vmatprep.mubr.bf16.mxu0 0
      %567 = vmatmul.mubr.bf16.gmra.mrb[0].mxu0 %v394
      %v568 = vpop.f32.mrb[0].mxu0
      %v569 = vadd.f32 %v260, %v568
      %v570 = vpop.f32.mrb[0].mxu0
      %v571 = vpop.f32.mrb[0].mxu0
      %v572 = vadd.f32 %v260, %v571
      %v573 = vpop.f32.mrb[0].mxu0
      %574 = vmatprep.mubr.bf16.mxu0 0
      %575 = vmatmul.mubr.bf16.gmra.mrb[0].mxu0 %v395
      %v576 = vpop.f32.mrb[0].mxu0
      %v577 = vadd.f32 %v260, %v576
      %v578 = vpop.f32.mrb[0].mxu0
      %v579 = vpop.f32.mrb[0].mxu0
      %v580 = vadd.f32 %v260, %v579
      %v581 = vpop.f32.mrb[0].mxu0
      %582 = vmatprep.mubr.bf16.mxu0 0
      %583 = vmatmul.mubr.bf16.gmra.mrb[0].mxu0 %v396
      %v584 = vpop.f32.mrb[0].mxu0
      %v585 = vadd.f32 %v260, %v584
      %v586 = vpop.f32.mrb[0].mxu0
      %v587 = vpop.f32.mrb[0].mxu0
      %v588 = vadd.f32 %v260, %v587
      %v589 = vpop.f32.mrb[0].mxu0
      %590 = vmatprep.mubr.bf16.mxu0 0
      %591 = vmatmul.mubr.bf16.gmra.mrb[0].mxu0 %v397
      %v592 = vpop.f32.mrb[0].mxu0
      %v593 = vadd.f32 %v260, %v592
      %v594 = vpop.f32.mrb[0].mxu0
      %v595 = vpop.f32.mrb[0].mxu0
      %v596 = vadd.f32 %v260, %v595
      %v597 = vpop.f32.mrb[0].mxu0
      %598 = vmatprep.mubr.bf16.mxu0 0
      %599 = vmatmul.mubr.bf16.gmra.mrb[0].mxu0 %v398
      %v600 = vpop.f32.mrb[0].mxu0
      %v601 = vadd.f32 %v260, %v600
      %v602 = vpop.f32.mrb[0].mxu0
      %v603 = vpop.f32.mrb[0].mxu0
      %v604 = vadd.f32 %v260, %v603
      %v605 = vpop.f32.mrb[0].mxu0
      %606 = vmatprep.mubr.bf16.mxu0 0
      %607 = vmatmul.mubr.bf16.gmra.mrb[0].mxu0 %v399
      %v608 = vpop.f32.mrb[0].mxu0
      %v609 = vadd.f32 %v260, %v608
      %v610 = vpop.f32.mrb[0].mxu0
      %v611 = vpop.f32.mrb[0].mxu0
      %v612 = vadd.f32 %v260, %v611
      %v613 = vpop.f32.mrb[0].mxu0
      %614 = vmatprep.mubr.bf16.mxu0 0
      %615 = vmatmul.mubr.bf16.gmra.mrb[0].mxu0 %v400
      %v616 = vpop.f32.mrb[0].mxu0
      %v617 = vadd.f32 %v260, %v616
      %v618 = vpop.f32.mrb[0].mxu0
      %v619 = vpop.f32.mrb[0].mxu0
      %v620 = vadd.f32 %v260, %v619
      %v621 = vpop.f32.mrb[0].mxu0
      %622 = vmatprep.mubr.bf16.mxu0 0
      %623 = vmatmul.mubr.bf16.gmra.mrb[0].mxu0 %v401
      %v624 = vpop.f32.mrb[0].mxu0
      %v625 = vadd.f32 %v260, %v624
      %v626 = vpop.f32.mrb[0].mxu0
      %v627 = vpop.f32.mrb[0].mxu0
      %v628 = vadd.f32 %v260, %v627
      %v629 = vpop.f32.mrb[0].mxu0
      %630 = vmatprep.mubr.bf16.mxu0 0
      %631 = vmatmul.mubr.bf16.gmra.mrb[0].mxu0 %v402
      %v632 = vpop.f32.mrb[0].mxu0
      %v633 = vadd.f32 %v260, %v632
      %v634 = vpop.f32.mrb[0].mxu0
      %v635 = vpop.f32.mrb[0].mxu0
      %v636 = vadd.f32 %v260, %v635
      %v637 = vpop.f32.mrb[0].mxu0
      %638 = vmatprep.mubr.bf16.mxu0 0
      %639 = vmatmul.mubr.bf16.gmra.mrb[0].mxu0 %v403
      %v640 = vpop.f32.mrb[0].mxu0
      %v641 = vadd.f32 %v260, %v640
      %v642 = vpop.f32.mrb[0].mxu0
      %v643 = vpop.f32.mrb[0].mxu0
      %v644 = vadd.f32 %v260, %v643
      %v645 = vpop.f32.mrb[0].mxu0
      %646 = vmatprep.mubr.bf16.mxu0 0
      %647 = vmatmul.mubr.bf16.gmra.mrb[0].mxu0 %v404
      %v648 = vpop.f32.mrb[0].mxu0
      %v649 = vadd.f32 %v260, %v648
      %v650 = vpop.f32.mrb[0].mxu0
      %v651 = vpop.f32.mrb[0].mxu0
      %v652 = vadd.f32 %v260, %v651
      %v653 = vpop.f32.mrb[0].mxu0
      %654 = vmatprep.mubr.bf16.mxu0 0
      %655 = vmatmul.mubr.bf16.gmra.mrb[0].mxu0 %v405
      %v656 = vpop.f32.mrb[0].mxu0
      %v657 = vadd.f32 %v260, %v656
      %v658 = vpop.f32.mrb[0].mxu0
      %v659 = vpop.f32.mrb[0].mxu0
      %v660 = vadd.f32 %v260, %v659
      %v661 = vpop.f32.mrb[0].mxu0
      %662 = vmatprep.mubr.bf16.mxu0 0
      %663 = vmatmul.mubr.bf16.gmra.mrb[0].mxu0 %v406
      %v664 = vpop.f32.mrb[0].mxu0
      %v665 = vadd.f32 %v260, %v664
      %v666 = vpop.f32.mrb[0].mxu0
      %v667 = vpop.f32.mrb[0].mxu0
      %v668 = vadd.f32 %v260, %v667
      %v669 = vpop.f32.mrb[0].mxu0
      %670 = vmatprep.mubr.bf16.mxu0 0
      %671 = vmatmul.mubr.bf16.gmra.mrb[0].mxu0 %v407
      %v672 = vpop.f32.mrb[0].mxu0
      %v673 = vadd.f32 %v260, %v672
      %v674 = vpop.f32.mrb[0].mxu0
      %v675 = vpop.f32.mrb[0].mxu0
      %v676 = vadd.f32 %v260, %v675
      %v677 = vpop.f32.mrb[0].mxu0
      %678 = vmatprep.mubr.bf16.mxu0 0
      %679 = vmatmul.mubr.bf16.gmra.mrb[0].mxu0 %v408
      %v680 = vpop.f32.mrb[0].mxu0
      %v681 = vadd.f32 %v260, %v680
      %v682 = vpop.f32.mrb[0].mxu0
      %v683 = vpop.f32.mrb[0].mxu0
      %v684 = vadd.f32 %v260, %v683
      %v685 = vpop.f32.mrb[0].mxu0
      %686 = vmatprep.mubr.bf16.mxu0 0
      %687 = vmatmul.mubr.bf16.gmra.mrb[0].mxu0 %v409
      %v688 = vpop.f32.mrb[0].mxu0
      %v689 = vadd.f32 %v260, %v688
      %v690 = vpop.f32.mrb[0].mxu0
      %v691 = vpop.f32.mrb[0].mxu0
      %v692 = vadd.f32 %v260, %v691
      %v693 = vpop.f32.mrb[0].mxu0
      %694 = vmatprep.mubr.bf16.mxu0 0
      %695 = vmatmul.mubr.bf16.gmra.mrb[0].mxu0 %v410
      %v696 = vpop.f32.mrb[0].mxu0
      %v697 = vadd.f32 %v260, %v696
      %v698 = vpop.f32.mrb[0].mxu0
      %v699 = vpop.f32.mrb[0].mxu0
      %v700 = vadd.f32 %v260, %v699
      %v701 = vpop.f32.mrb[0].mxu0
      %702 = vmatprep.mubr.bf16.mxu0 0
      %703 = vmatmul.mubr.bf16.gmra.mrb[0].mxu0 %v411
      %v704 = vpop.f32.mrb[0].mxu0
      %v705 = vadd.f32 %v260, %v704
      %v706 = vpop.f32.mrb[0].mxu0
      %v707 = vpop.f32.mrb[0].mxu0
      %v708 = vadd.f32 %v260, %v707
      %v709 = vpop.f32.mrb[0].mxu0
      %710 = vmatprep.mubr.bf16.mxu0 0
      %711 = vmatmul.mubr.bf16.gmra.mrb[0].mxu0 %v412
      %v712 = vpop.f32.mrb[0].mxu0
      %v713 = vadd.f32 %v260, %v712
      %v714 = vpop.f32.mrb[0].mxu0
      %v715 = vpop.f32.mrb[0].mxu0
      %v716 = vadd.f32 %v260, %v715
      %v717 = vpop.f32.mrb[0].mxu0
      %718 = vmatprep.mubr.bf16.mxu0 0
      %719 = vmatmul.mubr.bf16.gmra.mrb[0].mxu0 %v413
      %v720 = vpop.f32.mrb[0].mxu0
      %v721 = vadd.f32 %v260, %v720
      %v722 = vpop.f32.mrb[0].mxu0
      %v723 = vpop.f32.mrb[0].mxu0
      %v724 = vadd.f32 %v260, %v723
      %v725 = vpop.f32.mrb[0].mxu0
      %726 = vmatprep.mubr.bf16.mxu0 0
      %727 = vmatmul.mubr.bf16.gmra.mrb[0].mxu0 %v414
      %v728 = vpop.f32.mrb[0].mxu0
      %v729 = vadd.f32 %v260, %v728
      %v730 = vpop.f32.mrb[0].mxu0
      %v731 = vpop.f32.mrb[0].mxu0
      %v732 = vadd.f32 %v260, %v731
      %v733 = vpop.f32.mrb[0].mxu0
      %734 = vmatprep.mubr.bf16.mxu0 0
      %735 = vmatmul.mubr.bf16.gmra.mrb[0].mxu0 %v415
      %v736 = vpop.f32.mrb[0].mxu0
      %v737 = vadd.f32 %v260, %v736
      %v738 = vpop.f32.mrb[0].mxu0
      %v739 = vpop.f32.mrb[0].mxu0
      %v740 = vadd.f32 %v260, %v739
      %v741 = vpop.f32.mrb[0].mxu0
      %742 = vmatprep.mubr.bf16.mxu0 0
      %743 = vmatmul.mubr.bf16.gmra.mrb[0].mxu0 %v416
      %v744 = vpop.f32.mrb[0].mxu0
      %v745 = vadd.f32 %v260, %v744
      %v746 = vpop.f32.mrb[0].mxu0
      %v747 = vpop.f32.mrb[0].mxu0
      %v748 = vadd.f32 %v260, %v747
      %v749 = vpop.f32.mrb[0].mxu0
      %750 = vmatprep.mubr.bf16.mxu0 0
      %751 = vmatmul.mubr.bf16.gmra.mrb[0].mxu0 %v417
      %v752 = vpop.f32.mrb[0].mxu0
      %v753 = vadd.f32 %v260, %v752
      %v754 = vpop.f32.mrb[0].mxu0
      %v755 = vpop.f32.mrb[0].mxu0
      %v756 = vadd.f32 %v260, %v755
      %v757 = vpop.f32.mrb[0].mxu0
      %758 = vmatprep.mubr.bf16.mxu0 0
      %759 = vmatmul.mubr.bf16.gmra.mrb[0].mxu0 %v418
      %v760 = vpop.f32.mrb[0].mxu0
      %v761 = vadd.f32 %v260, %v760
      %v762 = vpop.f32.mrb[0].mxu0
      %v763 = vpop.f32.mrb[0].mxu0
      %v764 = vadd.f32 %v260, %v763
      %v765 = vpop.f32.mrb[0].mxu0
      %766 = vmatprep.mubr.bf16.mxu0 0
      %767 = vmatmul.mubr.bf16.gmra.mrb[0].mxu0 %v419
      %v768 = vpop.f32.mrb[0].mxu0
      %v769 = vadd.f32 %v260, %v768
      %v770 = vpop.f32.mrb[0].mxu0
      %v771 = vpop.f32.mrb[0].mxu0
      %v772 = vadd.f32 %v260, %v771
      %v773 = vpop.f32.mrb[0].mxu0
      %774 = vmatprep.mubr.bf16.mxu0 0
      %775 = vmatmul.mubr.bf16.gmra.mrb[0].mxu0 %v420
      %v776 = vpop.f32.mrb[0].mxu0
      %v777 = vadd.f32 %v260, %v776
      %v778 = vpop.f32.mrb[0].mxu0
      %v779 = vpop.f32.mrb[0].mxu0
      %v780 = vadd.f32 %v260, %v779
      %v781 = vpop.f32.mrb[0].mxu0
      %782 = vmatprep.mubr.bf16.mxu0 0
      %783 = vmatmul.mubr.bf16.gmra.mrb[0].mxu0 %v421
      %v784 = vpop.f32.mrb[0].mxu0
      %v785 = vadd.f32 %v260, %v784
      %v786 = vpop.f32.mrb[0].mxu0
      %v787 = vpop.f32.mrb[0].mxu0
      %v788 = vadd.f32 %v260, %v787
      %v789 = vpop.f32.mrb[0].mxu0
      %790 = vdwg.mxu0
      %v791 = vmax.f32 %v537, 0.0
      %v792 = vmax.f32 %v540, 0.0
      %v793 = vmax.f32 %v545, 0.0
      %v794 = vmax.f32 %v548, 0.0
      %v795 = vmax.f32 %v553, 0.0
      %v796 = vmax.f32 %v556, 0.0
      %v797 = vmax.f32 %v561, 0.0
      %v798 = vmax.f32 %v564, 0.0
      %v799 = vmax.f32 %v569, 0.0
      %v800 = vmax.f32 %v572, 0.0
      %v801 = vmax.f32 %v577, 0.0
      %v802 = vmax.f32 %v580, 0.0
      %v803 = vmax.f32 %v585, 0.0
      %v804 = vmax.f32 %v588, 0.0
      %v805 = vmax.f32 %v593, 0.0
      %v806 = vmax.f32 %v596, 0.0
      %v807 = vmax.f32 %v601, 0.0
      %v808 = vmax.f32 %v604, 0.0
      %v809 = vmax.f32 %v609, 0.0
      %v810 = vmax.f32 %v612, 0.0
      %v811 = vmax.f32 %v617, 0.0
      %v812 = vmax.f32 %v620, 0.0
      %v813 = vmax.f32 %v625, 0.0
      %v814 = vmax.f32 %v628, 0.0
      %v815 = vmax.f32 %v633, 0.0
      %v816 = vmax.f32 %v636, 0.0
      %v817 = vmax.f32 %v641, 0.0
      %v818 = vmax.f32 %v644, 0.0
      %v819 = vmax.f32 %v649, 0.0
      %v820 = vmax.f32 %v652, 0.0
      %v821 = vmax.f32 %v657, 0.0
      %v822 = vmax.f32 %v660, 0.0
      %v823 = vmax.f32 %v665, 0.0
      %v824 = vmax.f32 %v668, 0.0
      %v825 = vmax.f32 %v673, 0.0
      %v826 = vmax.f32 %v676, 0.0
      %v827 = vmax.f32 %v681, 0.0
      %v828 = vmax.f32 %v684, 0.0
      %v829 = vmax.f32 %v689, 0.0
      %v830 = vmax.f32 %v692, 0.0
      %v831 = vmax.f32 %v697, 0.0
      %v832 = vmax.f32 %v700, 0.0
      %v833 = vmax.f32 %v705, 0.0
      %v834 = vmax.f32 %v708, 0.0
      %v835 = vmax.f32 %v713, 0.0
      %v836 = vmax.f32 %v716, 0.0
      %v837 = vmax.f32 %v721, 0.0
      %v838 = vmax.f32 %v724, 0.0
      %v839 = vmax.f32 %v729, 0.0
      %v840 = vmax.f32 %v732, 0.0
      %v841 = vmax.f32 %v737, 0.0
      %v842 = vmax.f32 %v740, 0.0
      %v843 = vmax.f32 %v745, 0.0
      %v844 = vmax.f32 %v748, 0.0
      %v845 = vmax.f32 %v753, 0.0
      %v846 = vmax.f32 %v756, 0.0
      %v847 = vmax.f32 %v761, 0.0
      %v848 = vmax.f32 %v764, 0.0
      %v849 = vmax.f32 %v769, 0.0
      %v850 = vmax.f32 %v772, 0.0
      %v851 = vmax.f32 %v777, 0.0
      %v852 = vmax.f32 %v780, 0.0
      %v853 = vmax.f32 %v785, 0.0
      %v854 = vmax.f32 %v788, 0.0
      %855 = vst [vmem:[%s172] sm:$0xff] %v791
      %856 = vst [vmem:[%s172 + $0x8] sm:$0xff] %v792
      %857 = vst [vmem:[%s172 + $0x10] sm:$0xff] %v793
      %858 = vst [vmem:[%s172 + $0x18] sm:$0xff] %v794
      %859 = vst [vmem:[%s172 + $0x20] sm:$0xff] %v795
      %860 = vst [vmem:[%s172 + $0x28] sm:$0xff] %v796
      %861 = vst [vmem:[%s172 + $0x30] sm:$0xff] %v797
      %862 = vst [vmem:[%s172 + $0x38] sm:$0xff] %v798
      %863 = vst [vmem:[%s172 + $0x40] sm:$0xff] %v799
      %864 = vst [vmem:[%s172 + $0x48] sm:$0xff] %v800
      %865 = vst [vmem:[%s172 + $0x50] sm:$0xff] %v801
      %866 = vst [vmem:[%s172 + $0x58] sm:$0xff] %v802
      %867 = vst [vmem:[%s172 + $0x60] sm:$0xff] %v803
      %868 = vst [vmem:[%s172 + $0x68] sm:$0xff] %v804
      %869 = vst [vmem:[%s172 + $0x70] sm:$0xff] %v805
      %870 = vst [vmem:[%s172 + $0x78] sm:$0xff] %v806
      %871 = vst [vmem:[%s172 + $0x80] sm:$0xff] %v807
      %872 = vst [vmem:[%s172 + $0x88] sm:$0xff] %v808
      %873 = vst [vmem:[%s172 + $0x90] sm:$0xff] %v809
      %874 = vst [vmem:[%s172 + $0x98] sm:$0xff] %v810
      %875 = vst [vmem:[%s172 + $0xa0] sm:$0xff] %v811
      %876 = vst [vmem:[%s172 + $0xa8] sm:$0xff] %v812
      %877 = vst [vmem:[%s172 + $0xb0] sm:$0xff] %v813
      %878 = vst [vmem:[%s172 + $0xb8] sm:$0xff] %v814
      %879 = vst [vmem:[%s172 + $0xc0] sm:$0xff] %v815
      %880 = vst [vmem:[%s172 + $0xc8] sm:$0xff] %v816
      %881 = vst [vmem:[%s172 + $0xd0] sm:$0xff] %v817
      %882 = vst [vmem:[%s172 + $0xd8] sm:$0xff] %v818
      %883 = vst [vmem:[%s172 + $0xe0] sm:$0xff] %v819
      %884 = vst [vmem:[%s172 + $0xe8] sm:$0xff] %v820
      %885 = vst [vmem:[%s172 + $0xf0] sm:$0xff] %v821
      %886 = vst [vmem:[%s172 + $0xf8] sm:$0xff] %v822
      %887 = vst [vmem:[%s172 + $0x100] sm:$0xff] %v823
      %888 = vst [vmem:[%s172 + $0x108] sm:$0xff] %v824
      %889 = vst [vmem:[%s172 + $0x110] sm:$0xff] %v825
      %890 = vst [vmem:[%s172 + $0x118] sm:$0xff] %v826
      %891 = vst [vmem:[%s172 + $0x120] sm:$0xff] %v827
      %892 = vst [vmem:[%s172 + $0x128] sm:$0xff] %v828
      %893 = vst [vmem:[%s172 + $0x130] sm:$0xff] %v829
      %894 = vst [vmem:[%s172 + $0x138] sm:$0xff] %v830
      %895 = vst [vmem:[%s172 + $0x140] sm:$0xff] %v831
      %896 = vst [vmem:[%s172 + $0x148] sm:$0xff] %v832
      %897 = vst [vmem:[%s172 + $0x150] sm:$0xff] %v833
      %898 = vst [vmem:[%s172 + $0x158] sm:$0xff] %v834
      %899 = vst [vmem:[%s172 + $0x160] sm:$0xff] %v835
      %900 = vst [vmem:[%s172 + $0x168] sm:$0xff] %v836
      %901 = vst [vmem:[%s172 + $0x170] sm:$0xff] %v837
      %902 = vst [vmem:[%s172 + $0x178] sm:$0xff] %v838
      %903 = vst [vmem:[%s172 + $0x180] sm:$0xff] %v839
      %904 = vst [vmem:[%s172 + $0x188] sm:$0xff] %v840
      %905 = vst [vmem:[%s172 + $0x190] sm:$0xff] %v841
      %906 = vst [vmem:[%s172 + $0x198] sm:$0xff] %v842
      %907 = vst [vmem:[%s172 + $0x1a0] sm:$0xff] %v843
      %908 = vst [vmem:[%s172 + $0x1a8] sm:$0xff] %v844
      %909 = vst [vmem:[%s172 + $0x1b0] sm:$0xff] %v845
      %910 = vst [vmem:[%s172 + $0x1b8] sm:$0xff] %v846
      %911 = vst [vmem:[%s172 + $0x1c0] sm:$0xff] %v847
      %912 = vst [vmem:[%s172 + $0x1c8] sm:$0xff] %v848
      %913 = vst [vmem:[%s172 + $0x1d0] sm:$0xff] %v849
      %914 = vst [vmem:[%s172 + $0x1d8] sm:$0xff] %v850
      %915 = vst [vmem:[%s172 + $0x1e0] sm:$0xff] %v851
      %916 = vst [vmem:[%s172 + $0x1e8] sm:$0xff] %v852
      %917 = vst [vmem:[%s172 + $0x1f0] sm:$0xff] %v853
      %918 = vst [vmem:[%s172 + $0x1f8] sm:$0xff] %v854
      %s919 = smul.u32 64, %s14
      %p920 = scmp.lt.s32.totalorder %s919, 255
      %s921 = scalar_select %p920, %s919, 255
      %s922 = smul.addr %s921, 8
      %s923 = scalar_lea.vmem %s3, %s922
      // Predicated region
      $region33: #{lenet_forward.3} parent=31 // pred_check
        %p924 = pneg %p100
      $region34: #{lenet_forward.3} parent=31 // pred_check_branch
        %926 = sbr.rel (%p924) target = $region36
      $region35: #{lenet_forward.3} parent=31 // pred_region
        %s927 = smul.u32 64, %s14
      $region36: #{lenet_forward.3} parent=31 // pred_fallthru
        _
    $region32: #{lenet_forward.3} parent=5 // pred_fallthru
      _
    %p928 = scmp.le.s32.totalorder 2, %s9
    // Predicated region
    $region37: #{lenet_forward.3} parent=5 // pred_check
      %p929 = pneg %p928
    $region38: #{lenet_forward.3} parent=5 // pred_check_branch
      %931 = sbr.rel (%p929) target = $region40
    $region39: #{lenet_forward.3} parent=5 // pred_region
      %s932 = ssub.s32 %s9, 2
      // Predicated region
      $region41: #{lenet_forward.3} parent=39 // pred_check
        %p933 = pneg %p106
      $region42: #{lenet_forward.3} parent=39 // pred_check_branch
        %935 = sbr.rel (%p933) target = $region44
      $region43: #{lenet_forward.3} parent=39 // pred_region
        %s936 = smul.u32 64, %s15
        %p937 = scmp.lt.s32.totalorder %s936, 255
        %s938 = scalar_select %p937, %s936, 255
        %s939 = smul.addr %s938, 8
        %s940 = scalar_lea.vmem %s3, %s939
      $region44: #{lenet_forward.3} parent=39 // pred_fallthru
        _
    $region40: #{lenet_forward.3} parent=5 // pred_fallthru
      _
  $region6: #{lenet_forward.3} parent=0 // loop_footer
    %s13 = sadd.s32 1, %s9
  $region7: #{lenet_forward.3} parent=0 // loop_footer_branch
    %8 = sbr.rel target = $region3
  $region8: #{lenet_forward.3} parent=0 // loop_exit
    _

// kernel: lenet_forward.4
$region0: #{lenet_forward.4}
  #allocation0 [shape = 'u32[]', space=smem, size = 0x4, offset = 0x4, fixed_abs, tag = 'smem constant byte address 0x4 - core index']
  #allocation1 [shape = 'u32[144,128]{1,0:T(1,128)}', space=vmem, size = 0x12000, scoped, tag = 'internal scratch']
  %s0 = inlined_call_operand.vmem [shape: bf16[200,256], index: 0, kind: input, shape index: {}]
  %s1 = inlined_call_operand.vmem [shape: bf16[256,128], index: 1, kind: input, shape index: {}]
  %s2 = inlined_call_operand.vmem [shape: f32[1,128], index: 2, kind: input, shape index: {}]
  %s3 = inlined_call_operand.vmem [shape: f32[200,128], index: 3, kind: output, shape index: {}]
  %s4 = sld [smem:[#allocation0]]
  $region22: #{lenet_forward.4} parent=0
    _
  %s6 = ssub.s32 1, %s4
  %s7 = scalar_select 0, %s6, %s4
  // Predicated region
  $region2: #{lenet_forward.4} parent=0 // pred_check
    _
  $region3: #{lenet_forward.4} parent=0 // pred_check_branch
    %9 = sbr.rel (0) target = $region5
  $region4: #{lenet_forward.4} parent=0 // pred_region
    _
  $region5: #{lenet_forward.4} parent=0 // pred_fallthru
    _
  // Predicated region
  $region6: #{lenet_forward.4} parent=0 // pred_check
    _
  $region7: #{lenet_forward.4} parent=0 // pred_check_branch
    %11 = sbr.rel (0) target = $region9
  $region8: #{lenet_forward.4} parent=0 // pred_region
    _
  $region9: #{lenet_forward.4} parent=0 // pred_fallthru
    _
  // Predicated region
  $region10: #{lenet_forward.4} parent=0 // pred_check
    _
  $region11: #{lenet_forward.4} parent=0 // pred_check_branch
    %13 = sbr.rel (0) target = $region13
  $region12: #{lenet_forward.4} parent=0 // pred_region
    _
  $region13: #{lenet_forward.4} parent=0 // pred_fallthru
    _
  %v15 = vld [vmem:[%s0] sm:$0xff]
  %v16 = vld [vmem:[%s0 + $0x8] sm:$0xff]
  %v17 = vld [vmem:[%s0 + $0x10] sm:$0xff]
  %v18 = vld [vmem:[%s0 + $0x18] sm:$0xff]
  %v19 = vld [vmem:[%s0 + $0x20] sm:$0xff]
  %v20 = vld [vmem:[%s0 + $0x28] sm:$0xff]
  %v21 = vld [vmem:[%s0 + $0x30] sm:$0xff]
  %v22 = vld [vmem:[%s0 + $0x38] sm:$0xff]
  %v23 = vld [vmem:[%s0 + $0x40] sm:$0xff]
  %v24 = vld [vmem:[%s0 + $0x48] sm:$0xff]
  %v25 = vld [vmem:[%s0 + $0x50] sm:$0xff]
  %v26 = vld [vmem:[%s0 + $0x58] sm:$0xff]
  %v27 = vld [vmem:[%s0 + $0x60] sm:$0xff]
  %v28 = vld [vmem:[%s0 + $0x68] sm:$0xff]
  %v29 = vld [vmem:[%s0 + $0x70] sm:$0xff]
  %v30 = vld [vmem:[%s0 + $0x78] sm:$0xff]
  %v31 = vld [vmem:[%s0 + $0x80] sm:$0xff]
  %v32 = vld [vmem:[%s0 + $0x88] sm:$0xff]
  %v33 = vld [vmem:[%s0 + $0x90] sm:$0xff]
  %v34 = vld [vmem:[%s0 + $0x98] sm:$0xff]
  %v35 = vld [vmem:[%s0 + $0xa0] sm:$0xff]
  %v36 = vld [vmem:[%s0 + $0xa8] sm:$0xff]
  %v37 = vld [vmem:[%s0 + $0xb0] sm:$0xff]
  %v38 = vld [vmem:[%s0 + $0xb8] sm:$0xff]
  %v39 = vld [vmem:[%s0 + $0xc0] sm:$0xff]
  %v40 = vld [vmem:[%s1] sm:$0xf]
  %v41 = vld [vmem:[%s1 + $0x4] sm:$0xf]
  %v42 = vld [vmem:[%s1 + $0x8] sm:$0xf]
  %v43 = vld [vmem:[%s1 + $0xc] sm:$0xf]
  %v44 = vld [vmem:[%s1 + $0x10] sm:$0xf]
  %v45 = vld [vmem:[%s1 + $0x14] sm:$0xf]
  %v46 = vld [vmem:[%s1 + $0x18] sm:$0xf]
  %v47 = vld [vmem:[%s1 + $0x1c] sm:$0xf]
  %v48 = vld [vmem:[%s1 + $0x20] sm:$0xf]
  %v49 = vld [vmem:[%s1 + $0x24] sm:$0xf]
  %v50 = vld [vmem:[%s1 + $0x28] sm:$0xf]
  %v51 = vld [vmem:[%s1 + $0x2c] sm:$0xf]
  %v52 = vld [vmem:[%s1 + $0x30] sm:$0xf]
  %v53 = vld [vmem:[%s1 + $0x34] sm:$0xf]
  %v54 = vld [vmem:[%s1 + $0x38] sm:$0xf]
  %v55 = vld [vmem:[%s1 + $0x3c] sm:$0xf]
  %v56 = vld [vmem:[%s1 + $0x40] sm:$0xf]
  %v57 = vld [vmem:[%s1 + $0x44] sm:$0xf]
  %v58 = vld [vmem:[%s1 + $0x48] sm:$0xf]
  %v59 = vld [vmem:[%s1 + $0x4c] sm:$0xf]
  %v60 = vld [vmem:[%s1 + $0x50] sm:$0xf]
  %v61 = vld [vmem:[%s1 + $0x54] sm:$0xf]
  %v62 = vld [vmem:[%s1 + $0x58] sm:$0xf]
  %v63 = vld [vmem:[%s1 + $0x5c] sm:$0xf]
  %v64 = vld [vmem:[%s1 + $0x60] sm:$0xf]
  %v65 = vld [vmem:[%s1 + $0x64] sm:$0xf]
  %v66 = vld [vmem:[%s1 + $0x68] sm:$0xf]
  %v67 = vld [vmem:[%s1 + $0x6c] sm:$0xf]
  %v68 = vld [vmem:[%s1 + $0x70] sm:$0xf]
  %v69 = vld [vmem:[%s1 + $0x74] sm:$0xf]
  %v70 = vld [vmem:[%s1 + $0x78] sm:$0xf]
  %v71 = vld [vmem:[%s1 + $0x7c] sm:$0xf]
  %v72 = vld [vmem:[%s2] sm:$0x1]
  %v74 = vlaneseq
  %v75 = vshrl.u32 %v74, 7
  %v76 = vsub.s32 0, %v75
  %v77 = vrot.slane %v72, %v76
  %v104 = vunpack.c.l.b16 %v15
  %v105 = vunpack.c.h.b16 %v15
  %v106 = vunpack.c.l.b16 %v16
  %v107 = vunpack.c.h.b16 %v16
  %v108 = vunpack.c.l.b16 %v17
  %v109 = vunpack.c.h.b16 %v17
  %v110 = vunpack.c.l.b16 %v18
  %v111 = vunpack.c.h.b16 %v18
  %v112 = vunpack.c.l.b16 %v19
  %v113 = vunpack.c.h.b16 %v19
  %v114 = vunpack.c.l.b16 %v20
  %v115 = vunpack.c.h.b16 %v20
  %v116 = vunpack.c.l.b16 %v21
  %v117 = vunpack.c.h.b16 %v21
  %v118 = vunpack.c.l.b16 %v22
  %v119 = vunpack.c.h.b16 %v22
  %v120 = vunpack.c.l.b16 %v23
  %v121 = vunpack.c.h.b16 %v23
  %v122 = vunpack.c.l.b16 %v24
  %v123 = vunpack.c.h.b16 %v24
  %v124 = vunpack.c.l.b16 %v25
  %v125 = vunpack.c.h.b16 %v25
  %v126 = vunpack.c.l.b16 %v26
  %v127 = vunpack.c.h.b16 %v26
  %v128 = vunpack.c.l.b16 %v27
  %v129 = vunpack.c.h.b16 %v27
  %v130 = vunpack.c.l.b16 %v28
  %v131 = vunpack.c.h.b16 %v28
  %v132 = vunpack.c.l.b16 %v29
  %v133 = vunpack.c.h.b16 %v29
  %v134 = vunpack.c.l.b16 %v30
  %v135 = vunpack.c.h.b16 %v30
  %v136 = vunpack.c.l.b16 %v31
  %v137 = vunpack.c.h.b16 %v31
  %v138 = vunpack.c.l.b16 %v32
  %v139 = vunpack.c.h.b16 %v32
  %v140 = vunpack.c.l.b16 %v33
  %v141 = vunpack.c.h.b16 %v33
  %v142 = vunpack.c.l.b16 %v34
  %v143 = vunpack.c.h.b16 %v34
  %v144 = vunpack.c.l.b16 %v35
  %v145 = vunpack.c.h.b16 %v35
  %v146 = vunpack.c.l.b16 %v36
  %v147 = vunpack.c.h.b16 %v36
  %v148 = vunpack.c.l.b16 %v37
  %v149 = vunpack.c.h.b16 %v37
  %v150 = vunpack.c.l.b16 %v38
  %v151 = vunpack.c.h.b16 %v38
  %v152 = vunpack.c.l.b16 %v39
  %v153 = vunpack.c.h.b16 %v39
  %v154 = vpack.c.b16 %v106, %v104
  %v155 = vpack.c.b16 %v107, %v105
  %v156 = vpack.c.b16 %v110, %v108
  %v157 = vpack.c.b16 %v111, %v109
  %v158 = vpack.c.b16 %v114, %v112
  %v159 = vpack.c.b16 %v115, %v113
  %v160 = vpack.c.b16 %v118, %v116
  %v161 = vpack.c.b16 %v119, %v117
  %v162 = vpack.c.b16 %v122, %v120
  %v163 = vpack.c.b16 %v123, %v121
  %v164 = vpack.c.b16 %v126, %v124
  %v165 = vpack.c.b16 %v127, %v125
  %v166 = vpack.c.b16 %v130, %v128
  %v167 = vpack.c.b16 %v131, %v129
  %v168 = vpack.c.b16 %v134, %v132
  %v169 = vpack.c.b16 %v135, %v133
  %v170 = vpack.c.b16 %v138, %v136
  %v171 = vpack.c.b16 %v139, %v137
  %v172 = vpack.c.b16 %v142, %v140
  %v173 = vpack.c.b16 %v143, %v141
  %v174 = vpack.c.b16 %v146, %v144
  %v175 = vpack.c.b16 %v147, %v145
  %v176 = vpack.c.b16 %v150, %v148
  %v177 = vpack.c.b16 %v151, %v149
  %v178 = vpack.c.b16 %v152, %v152
  %v179 = vpack.c.b16 %v153, %v153
  %v238 = vunpack.c.l.b16 %v40
  %v239 = vunpack.c.l.b16 %v41
  %v240 = vunpack.c.l.b16 %v42
  %v241 = vunpack.c.l.b16 %v43
  %v242 = vunpack.c.l.b16 %v44
  %v243 = vunpack.c.l.b16 %v45
  %v244 = vunpack.c.l.b16 %v46
  %v245 = vunpack.c.l.b16 %v47
  %v246 = vunpack.c.l.b16 %v48
  %v247 = vunpack.c.l.b16 %v49
  %v248 = vunpack.c.l.b16 %v50
  %v249 = vunpack.c.l.b16 %v51
  %v250 = vunpack.c.l.b16 %v52
  %v251 = vunpack.c.l.b16 %v53
  %v252 = vunpack.c.l.b16 %v54
  %v253 = vunpack.c.l.b16 %v55
  %v254 = vunpack.c.l.b16 %v56
  %v255 = vunpack.c.l.b16 %v57
  %v256 = vunpack.c.l.b16 %v58
  %v257 = vunpack.c.l.b16 %v59
  %v258 = vunpack.c.l.b16 %v60
  %v259 = vunpack.c.l.b16 %v61
  %v260 = vunpack.c.l.b16 %v62
  %v261 = vunpack.c.l.b16 %v63
  %v262 = vunpack.c.l.b16 %v64
  %v263 = vunpack.c.l.b16 %v65
  %v264 = vunpack.c.l.b16 %v66
  %v265 = vunpack.c.l.b16 %v67
  %v266 = vunpack.c.l.b16 %v68
  %v267 = vunpack.c.l.b16 %v69
  %v268 = vunpack.c.l.b16 %v70
  %v269 = vunpack.c.l.b16 %v71
  %v270 = vpack.c.b16 %v239, %v238
  %v271 = vpack.c.b16 %v241, %v240
  %v272 = vpack.c.b16 %v243, %v242
  %v273 = vpack.c.b16 %v245, %v244
  %v274 = vpack.c.b16 %v247, %v246
  %v275 = vpack.c.b16 %v249, %v248
  %v276 = vpack.c.b16 %v251, %v250
  %v277 = vpack.c.b16 %v253, %v252
  %v278 = vpack.c.b16 %v255, %v254
  %v279 = vpack.c.b16 %v257, %v256
  %v280 = vpack.c.b16 %v259, %v258
  %v281 = vpack.c.b16 %v261, %v260
  %v282 = vpack.c.b16 %v263, %v262
  %v283 = vpack.c.b16 %v265, %v264
  %v284 = vpack.c.b16 %v267, %v266
  %v285 = vpack.c.b16 %v269, %v268
  %302 = vmatprep.subr.bf16.mxu0 0
  %303 = vmatpush1.bf16.msra.mxu0 %v270
  %304 = vmatprep.subr.bf16.mxu0 0
  %305 = vmatpush1.bf16.msra.mxu0 %v271
  %306 = vmatprep.subr.bf16.mxu0 0
  %307 = vmatpush1.bf16.msra.mxu0 %v272
  %308 = vmatprep.subr.bf16.mxu0 0
  %309 = vmatpush1.bf16.msra.mxu0 %v273
  %310 = vmatprep.subr.bf16.mxu0 0
  %311 = vmatpush1.bf16.msra.mxu0 %v274
  %312 = vmatprep.subr.bf16.mxu0 0
  %313 = vmatpush1.bf16.msra.mxu0 %v275
  %314 = vmatprep.subr.bf16.mxu0 0
  %315 = vmatpush1.bf16.msra.mxu0 %v276
  %316 = vmatprep.subr.bf16.mxu0 0
  %317 = vmatpush1.bf16.msra.mxu0 %v277
  %318 = vmatprep.subr.bf16.mxu0 0
  %319 = vmatpush1.bf16.msra.mxu0 %v278
  %320 = vmatprep.subr.bf16.mxu0 0
  %321 = vmatpush1.bf16.msra.mxu0 %v279
  %322 = vmatprep.subr.bf16.mxu0 0
  %323 = vmatpush1.bf16.msra.mxu0 %v280
  %324 = vmatprep.subr.bf16.mxu0 0
  %325 = vmatpush1.bf16.msra.mxu0 %v281
  %326 = vmatprep.subr.bf16.mxu0 0
  %327 = vmatpush1.bf16.msra.mxu0 %v282
  %328 = vmatprep.subr.bf16.mxu0 0
  %329 = vmatpush1.bf16.msra.mxu0 %v283
  %330 = vmatprep.subr.bf16.mxu0 0
  %331 = vmatpush1.bf16.msra.mxu0 %v284
  %332 = vmatprep.subr.bf16.mxu0 0
  %333 = vmatpush1.bf16.msra.mxu0 %v285
  %334 = vmatprep.mubr.bf16.mxu0 %v155
  %335 = vmatmul.mubr.bf16.gmra.mrb[0].mxu0 %v154
  %v336 = vpop.f32.mrb[0].mxu0
  %v337 = vadd.f32 %v77, %v336
  %v338 = vpop.f32.mrb[0].mxu0
  %v339 = vpop.f32.mrb[0].mxu0
  %v340 = vadd.f32 %v77, %v339
  %v341 = vpop.f32.mrb[0].mxu0
  %342 = vmatprep.mubr.bf16.mxu0 %v157
  %343 = vmatmul.mubr.bf16.gmra.mrb[0].mxu0 %v156
  %v344 = vpop.f32.mrb[0].mxu0
  %v345 = vadd.f32 %v77, %v344
  %v346 = vpop.f32.mrb[0].mxu0
  %v347 = vpop.f32.mrb[0].mxu0
  %v348 = vadd.f32 %v77, %v347
  %v349 = vpop.f32.mrb[0].mxu0
  %350 = vmatprep.mubr.bf16.mxu0 %v159
  %351 = vmatmul.mubr.bf16.gmra.mrb[0].mxu0 %v158
  %v352 = vpop.f32.mrb[0].mxu0
  %v353 = vadd.f32 %v77, %v352
  %v354 = vpop.f32.mrb[0].mxu0
  %v355 = vpop.f32.mrb[0].mxu0
  %v356 = vadd.f32 %v77, %v355
  %v357 = vpop.f32.mrb[0].mxu0
  %358 = vmatprep.mubr.bf16.mxu0 %v161
  %359 = vmatmul.mubr.bf16.gmra.mrb[0].mxu0 %v160
  %v360 = vpop.f32.mrb[0].mxu0
  %v361 = vadd.f32 %v77, %v360
  %v362 = vpop.f32.mrb[0].mxu0
  %v363 = vpop.f32.mrb[0].mxu0
  %v364 = vadd.f32 %v77, %v363
  %v365 = vpop.f32.mrb[0].mxu0
  %366 = vmatprep.mubr.bf16.mxu0 %v163
  %367 = vmatmul.mubr.bf16.gmra.mrb[0].mxu0 %v162
  %v368 = vpop.f32.mrb[0].mxu0
  %v369 = vadd.f32 %v77, %v368
  %v370 = vpop.f32.mrb[0].mxu0
  %v371 = vpop.f32.mrb[0].mxu0
  %v372 = vadd.f32 %v77, %v371
  %v373 = vpop.f32.mrb[0].mxu0
  %374 = vmatprep.mubr.bf16.mxu0 %v165
  %375 = vmatmul.mubr.bf16.gmra.mrb[0].mxu0 %v164
  %v376 = vpop.f32.mrb[0].mxu0
  %v377 = vadd.f32 %v77, %v376
  %v378 = vpop.f32.mrb[0].mxu0
  %v379 = vpop.f32.mrb[0].mxu0
  %v380 = vadd.f32 %v77, %v379
  %v381 = vpop.f32.mrb[0].mxu0
  %382 = vmatprep.mubr.bf16.mxu0 %v167
  %383 = vmatmul.mubr.bf16.gmra.mrb[0].mxu0 %v166
  %v384 = vpop.f32.mrb[0].mxu0
  %v385 = vadd.f32 %v77, %v384
  %v386 = vpop.f32.mrb[0].mxu0
  %v387 = vpop.f32.mrb[0].mxu0
  %v388 = vadd.f32 %v77, %v387
  %v389 = vpop.f32.mrb[0].mxu0
  %390 = vmatprep.mubr.bf16.mxu0 %v169
  %391 = vmatmul.mubr.bf16.gmra.mrb[0].mxu0 %v168
  %v392 = vpop.f32.mrb[0].mxu0
  %v393 = vadd.f32 %v77, %v392
  %v394 = vpop.f32.mrb[0].mxu0
  %v395 = vpop.f32.mrb[0].mxu0
  %v396 = vadd.f32 %v77, %v395
  %v397 = vpop.f32.mrb[0].mxu0
  %398 = vmatprep.mubr.bf16.mxu0 %v171
  %399 = vmatmul.mubr.bf16.gmra.mrb[0].mxu0 %v170
  %v400 = vpop.f32.mrb[0].mxu0
  %v401 = vadd.f32 %v77, %v400
  %v402 = vpop.f32.mrb[0].mxu0
  %v403 = vpop.f32.mrb[0].mxu0
  %v404 = vadd.f32 %v77, %v403
  %v405 = vpop.f32.mrb[0].mxu0
  %406 = vmatprep.mubr.bf16.mxu0 %v173
  %407 = vmatmul.mubr.bf16.gmra.mrb[0].mxu0 %v172
  %v408 = vpop.f32.mrb[0].mxu0
  %v409 = vadd.f32 %v77, %v408
  %v410 = vpop.f32.mrb[0].mxu0
  %v411 = vpop.f32.mrb[0].mxu0
  %v412 = vadd.f32 %v77, %v411
  %v413 = vpop.f32.mrb[0].mxu0
  %414 = vmatprep.mubr.bf16.mxu0 %v175
  %415 = vmatmul.mubr.bf16.gmra.mrb[0].mxu0 %v174
  %v416 = vpop.f32.mrb[0].mxu0
  %v417 = vadd.f32 %v77, %v416
  %v418 = vpop.f32.mrb[0].mxu0
  %v419 = vpop.f32.mrb[0].mxu0
  %v420 = vadd.f32 %v77, %v419
  %v421 = vpop.f32.mrb[0].mxu0
  %422 = vmatprep.mubr.bf16.mxu0 %v177
  %423 = vmatmul.mubr.bf16.gmra.mrb[0].mxu0 %v176
  %v424 = vpop.f32.mrb[0].mxu0
  %v425 = vadd.f32 %v77, %v424
  %v426 = vpop.f32.mrb[0].mxu0
  %v427 = vpop.f32.mrb[0].mxu0
  %v428 = vadd.f32 %v77, %v427
  %v429 = vpop.f32.mrb[0].mxu0
  %430 = vmatprep.mubr.bf16.mxu0 %v179
  %431 = vmatmul.mubr.bf16.gmra.mrb[0].mxu0 %v178
  %v432 = vpop.f32.mrb[0].mxu0
  %v433 = vadd.f32 %v77, %v432
  %v434 = vpop.f32.mrb[0].mxu0
  %v435 = vpop.f32.mrb[0].mxu0
  %v436 = vpop.f32.mrb[0].mxu0
  %437 = vdwg.mxu0
  %v438 = vmax.f32 %v337, 0.0
  %v439 = vmax.f32 %v340, 0.0
  %v440 = vmax.f32 %v345, 0.0
  %v441 = vmax.f32 %v348, 0.0
  %v442 = vmax.f32 %v353, 0.0
  %v443 = vmax.f32 %v356, 0.0
  %v444 = vmax.f32 %v361, 0.0
  %v445 = vmax.f32 %v364, 0.0
  %v446 = vmax.f32 %v369, 0.0
  %v447 = vmax.f32 %v372, 0.0
  %v448 = vmax.f32 %v377, 0.0
  %v449 = vmax.f32 %v380, 0.0
  %v450 = vmax.f32 %v385, 0.0
  %v451 = vmax.f32 %v388, 0.0
  %v452 = vmax.f32 %v393, 0.0
  %v453 = vmax.f32 %v396, 0.0
  %v454 = vmax.f32 %v401, 0.0
  %v455 = vmax.f32 %v404, 0.0
  %v456 = vmax.f32 %v409, 0.0
  %v457 = vmax.f32 %v412, 0.0
  %v458 = vmax.f32 %v417, 0.0
  %v459 = vmax.f32 %v420, 0.0
  %v460 = vmax.f32 %v425, 0.0
  %v461 = vmax.f32 %v428, 0.0
  %v462 = vmax.f32 %v433, 0.0
  %463 = vst [vmem:[%s3] sm:$0xff] %v438
  %464 = vst [vmem:[%s3 + $0x8] sm:$0xff] %v439
  %465 = vst [vmem:[%s3 + $0x10] sm:$0xff] %v440
  %466 = vst [vmem:[%s3 + $0x18] sm:$0xff] %v441
  %467 = vst [vmem:[%s3 + $0x20] sm:$0xff] %v442
  %468 = vst [vmem:[%s3 + $0x28] sm:$0xff] %v443
  %469 = vst [vmem:[%s3 + $0x30] sm:$0xff] %v444
  %470 = vst [vmem:[%s3 + $0x38] sm:$0xff] %v445
  %471 = vst [vmem:[%s3 + $0x40] sm:$0xff] %v446
  %472 = vst [vmem:[%s3 + $0x48] sm:$0xff] %v447
  %473 = vst [vmem:[%s3 + $0x50] sm:$0xff] %v448
  %474 = vst [vmem:[%s3 + $0x58] sm:$0xff] %v449
  %475 = vst [vmem:[%s3 + $0x60] sm:$0xff] %v450
  %476 = vst [vmem:[%s3 + $0x68] sm:$0xff] %v451
  %477 = vst [vmem:[%s3 + $0x70] sm:$0xff] %v452
  %478 = vst [vmem:[%s3 + $0x78] sm:$0xff] %v453
  %479 = vst [vmem:[%s3 + $0x80] sm:$0xff] %v454
  %480 = vst [vmem:[%s3 + $0x88] sm:$0xff] %v455
  %481 = vst [vmem:[%s3 + $0x90] sm:$0xff] %v456
  %482 = vst [vmem:[%s3 + $0x98] sm:$0xff] %v457
  %483 = vst [vmem:[%s3 + $0xa0] sm:$0xff] %v458
  %484 = vst [vmem:[%s3 + $0xa8] sm:$0xff] %v459
  %485 = vst [vmem:[%s3 + $0xb0] sm:$0xff] %v460
  %486 = vst [vmem:[%s3 + $0xb8] sm:$0xff] %v461
  %487 = vst [vmem:[%s3 + $0xc0] sm:$0xff] %v462
  // Predicated region
  $region14: #{lenet_forward.4} parent=0 // pred_check
    _
  $region15: #{lenet_forward.4} parent=0 // pred_check_branch
    %489 = sbr.rel (0) target = $region17
  $region16: #{lenet_forward.4} parent=0 // pred_region
    _
  $region17: #{lenet_forward.4} parent=0 // pred_fallthru
    _
  // Predicated region
  $region18: #{lenet_forward.4} parent=0 // pred_check
    _
  $region19: #{lenet_forward.4} parent=0 // pred_check_branch
    %491 = sbr.rel (0) target = $region21
  $region20: #{lenet_forward.4} parent=0 // pred_region
    _
  $region21: #{lenet_forward.4} parent=0 // pred_fallthru
    _

// kernel: lenet_forward.5
$region0: #{lenet_forward.5}
  #allocation0 [shape = 'u32[]', space=smem, size = 0x4, offset = 0x4, fixed_abs, tag = 'smem constant byte address 0x4 - core index']
  #allocation1 [shape = 'u32[144,128]{1,0:T(1,128)}', space=vmem, size = 0x12000, scoped, tag = 'internal scratch']
  %s0 = inlined_call_operand.vmem [shape: f32[8,512], index: 0, kind: input, shape index: {}]
  %s1 = inlined_call_operand.vmem [shape: f32[512,128], index: 1, kind: input, shape index: {}]
  %s2 = inlined_call_operand.vmem [shape: f32[1,128], index: 2, kind: input, shape index: {}]
  %s3 = inlined_call_operand.vmem [shape: f32[128,128], index: 3, kind: input, shape index: {}]
  %s4 = inlined_call_operand.vmem [shape: f32[1,128], index: 4, kind: input, shape index: {}]
  %s5 = inlined_call_operand.vmem [shape: f32[128,128], index: 5, kind: input, shape index: {}]
  %s6 = inlined_call_operand.vmem [shape: f32[1,128], index: 6, kind: input, shape index: {}]
  %s7 = inlined_call_operand.vmem [shape: f32[8,128], index: 7, kind: output, shape index: {}]
  %s8 = sld [smem:[#allocation0]]
  $region38: #{lenet_forward.5} parent=0
    _
  %s10 = ssub.s32 1, %s8
  %s11 = scalar_select 0, %s10, %s8
  // Predicated region
  $region2: #{lenet_forward.5} parent=0 // pred_check
    _
  $region3: #{lenet_forward.5} parent=0 // pred_check_branch
    %13 = sbr.rel (0) target = $region5
  $region4: #{lenet_forward.5} parent=0 // pred_region
    _
  $region5: #{lenet_forward.5} parent=0 // pred_fallthru
    _
  // Predicated region
  $region6: #{lenet_forward.5} parent=0 // pred_check
    _
  $region7: #{lenet_forward.5} parent=0 // pred_check_branch
    %15 = sbr.rel (0) target = $region9
  $region8: #{lenet_forward.5} parent=0 // pred_region
    _
  $region9: #{lenet_forward.5} parent=0 // pred_fallthru
    _
  // Predicated region
  $region10: #{lenet_forward.5} parent=0 // pred_check
    _
  $region11: #{lenet_forward.5} parent=0 // pred_check_branch
    %17 = sbr.rel (0) target = $region13
  $region12: #{lenet_forward.5} parent=0 // pred_region
    _
  $region13: #{lenet_forward.5} parent=0 // pred_fallthru
    _
  // Predicated region
  $region14: #{lenet_forward.5} parent=0 // pred_check
    _
  $region15: #{lenet_forward.5} parent=0 // pred_check_branch
    %19 = sbr.rel (0) target = $region17
  $region16: #{lenet_forward.5} parent=0 // pred_region
    _
  $region17: #{lenet_forward.5} parent=0 // pred_fallthru
    _
  // Predicated region
  $region18: #{lenet_forward.5} parent=0 // pred_check
    _
  $region19: #{lenet_forward.5} parent=0 // pred_check_branch
    %21 = sbr.rel (0) target = $region21
  $region20: #{lenet_forward.5} parent=0 // pred_region
    _
  $region21: #{lenet_forward.5} parent=0 // pred_fallthru
    _
  // Predicated region
  $region22: #{lenet_forward.5} parent=0 // pred_check
    _
  $region23: #{lenet_forward.5} parent=0 // pred_check_branch
    %23 = sbr.rel (0) target = $region25
  $region24: #{lenet_forward.5} parent=0 // pred_region
    _
  $region25: #{lenet_forward.5} parent=0 // pred_fallthru
    _
  // Predicated region
  $region26: #{lenet_forward.5} parent=0 // pred_check
    _
  $region27: #{lenet_forward.5} parent=0 // pred_check_branch
    %25 = sbr.rel (0) target = $region29
  $region28: #{lenet_forward.5} parent=0 // pred_region
    _
  $region29: #{lenet_forward.5} parent=0 // pred_fallthru
    _
  %v26 = vld [vmem:[%s0] sm:$0xff]
  %v27 = vld [vmem:[%s0 + $0x8] sm:$0xff]
  %v28 = vld [vmem:[%s0 + $0x10] sm:$0xff]
  %v29 = vld [vmem:[%s0 + $0x18] sm:$0xff]
  %v30 = vld [vmem:[%s1] sm:$0xff]
  %v31 = vld [vmem:[%s1 + $0x8] sm:$0xff]
  %v32 = vld [vmem:[%s1 + $0x10] sm:$0xff]
  %v33 = vld [vmem:[%s1 + $0x18] sm:$0xff]
  %v34 = vld [vmem:[%s1 + $0x20] sm:$0xff]
  %v35 = vld [vmem:[%s1 + $0x28] sm:$0xff]
  %v36 = vld [vmem:[%s1 + $0x30] sm:$0xff]
  %v37 = vld [vmem:[%s1 + $0x38] sm:$0xff]
  %v38 = vld [vmem:[%s1 + $0x40] sm:$0xff]
  %v39 = vld [vmem:[%s1 + $0x48] sm:$0xff]
  %v40 = vld [vmem:[%s1 + $0x50] sm:$0xff]
  %v41 = vld [vmem:[%s1 + $0x58] sm:$0xff]
  %v42 = vld [vmem:[%s1 + $0x60] sm:$0xff]
  %v43 = vld [vmem:[%s1 + $0x68] sm:$0xff]
  %v44 = vld [vmem:[%s1 + $0x70] sm:$0xff]
  %v45 = vld [vmem:[%s1 + $0x78] sm:$0xff]
  %v46 = vld [vmem:[%s1 + $0x80] sm:$0xff]
  %v47 = vld [vmem:[%s1 + $0x88] sm:$0xff]
  %v48 = vld [vmem:[%s1 + $0x90] sm:$0xff]
  %v49 = vld [vmem:[%s1 + $0x98] sm:$0xff]
  %v50 = vld [vmem:[%s1 + $0xa0] sm:$0xff]
  %v51 = vld [vmem:[%s1 + $0xa8] sm:$0xff]
  %v52 = vld [vmem:[%s1 + $0xb0] sm:$0xff]
  %v53 = vld [vmem:[%s1 + $0xb8] sm:$0xff]
  %v54 = vld [vmem:[%s1 + $0xc0] sm:$0xff]
  %v55 = vld [vmem:[%s1 + $0xc8] sm:$0xff]
  %v56 = vld [vmem:[%s1 + $0xd0] sm:$0xff]
  %v57 = vld [vmem:[%s1 + $0xd8] sm:$0xff]
  %v58 = vld [vmem:[%s1 + $0xe0] sm:$0xff]
  %v59 = vld [vmem:[%s1 + $0xe8] sm:$0xff]
  %v60 = vld [vmem:[%s1 + $0xf0] sm:$0xff]
  %v61 = vld [vmem:[%s1 + $0xf8] sm:$0xff]
  %v62 = vld [vmem:[%s1 + $0x100] sm:$0xff]
  %v63 = vld [vmem:[%s1 + $0x108] sm:$0xff]
  %v64 = vld [vmem:[%s1 + $0x110] sm:$0xff]
  %v65 = vld [vmem:[%s1 + $0x118] sm:$0xff]
  %v66 = vld [vmem:[%s1 + $0x120] sm:$0xff]
  %v67 = vld [vmem:[%s1 + $0x128] sm:$0xff]
  %v68 = vld [vmem:[%s1 + $0x130] sm:$0xff]
  %v69 = vld [vmem:[%s1 + $0x138] sm:$0xff]
  %v70 = vld [vmem:[%s1 + $0x140] sm:$0xff]
  %v71 = vld [vmem:[%s1 + $0x148] sm:$0xff]
  %v72 = vld [vmem:[%s1 + $0x150] sm:$0xff]
  %v73 = vld [vmem:[%s1 + $0x158] sm:$0xff]
  %v74 = vld [vmem:[%s1 + $0x160] sm:$0xff]
  %v75 = vld [vmem:[%s1 + $0x168] sm:$0xff]
  %v76 = vld [vmem:[%s1 + $0x170] sm:$0xff]
  %v77 = vld [vmem:[%s1 + $0x178] sm:$0xff]
  %v78 = vld [vmem:[%s1 + $0x180] sm:$0xff]
  %v79 = vld [vmem:[%s1 + $0x188] sm:$0xff]
  %v80 = vld [vmem:[%s1 + $0x190] sm:$0xff]
  %v81 = vld [vmem:[%s1 + $0x198] sm:$0xff]
  %v82 = vld [vmem:[%s1 + $0x1a0] sm:$0xff]
  %v83 = vld [vmem:[%s1 + $0x1a8] sm:$0xff]
  %v84 = vld [vmem:[%s1 + $0x1b0] sm:$0xff]
  %v85 = vld [vmem:[%s1 + $0x1b8] sm:$0xff]
  %v86 = vld [vmem:[%s1 + $0x1c0] sm:$0xff]
  %v87 = vld [vmem:[%s1 + $0x1c8] sm:$0xff]
  %v88 = vld [vmem:[%s1 + $0x1d0] sm:$0xff]
  %v89 = vld [vmem:[%s1 + $0x1d8] sm:$0xff]
  %v90 = vld [vmem:[%s1 + $0x1e0] sm:$0xff]
  %v91 = vld [vmem:[%s1 + $0x1e8] sm:$0xff]
  %v92 = vld [vmem:[%s1 + $0x1f0] sm:$0xff]
  %v93 = vld [vmem:[%s1 + $0x1f8] sm:$0xff]
  %v94 = vld [vmem:[%s2] sm:$0x1]
  %v96 = vlaneseq
  %v97 = vshrl.u32 %v96, 7
  %v98 = vsub.s32 0, %v97
  %v99 = vrot.slane %v94, %v98
  %101 = vmatprep.subr.mxu0 0.0
  %102 = vmatpush1.msra.mxu0 %v30
  %103 = vmatprep.subr.mxu0 0.0
  %104 = vmatpush1.msra.mxu0 %v31
  %105 = vmatprep.subr.mxu0 0.0
  %106 = vmatpush1.msra.mxu0 %v32
  %107 = vmatprep.subr.mxu0 0.0
  %108 = vmatpush1.msra.mxu0 %v33
  %109 = vmatprep.subr.mxu0 0.0
  %110 = vmatpush1.msra.mxu0 %v34
  %111 = vmatprep.subr.mxu0 0.0
  %112 = vmatpush1.msra.mxu0 %v35
  %113 = vmatprep.subr.mxu0 0.0
  %114 = vmatpush1.msra.mxu0 %v36
  %115 = vmatprep.subr.mxu0 0.0
  %116 = vmatpush1.msra.mxu0 %v37
  %117 = vmatprep.subr.mxu0 0.0
  %118 = vmatpush1.msra.mxu0 %v38
  %119 = vmatprep.subr.mxu0 0.0
  %120 = vmatpush1.msra.mxu0 %v39
  %121 = vmatprep.subr.mxu0 0.0
  %122 = vmatpush1.msra.mxu0 %v40
  %123 = vmatprep.subr.mxu0 0.0
  %124 = vmatpush1.msra.mxu0 %v41
  %125 = vmatprep.subr.mxu0 0.0
  %126 = vmatpush1.msra.mxu0 %v42
  %127 = vmatprep.subr.mxu0 0.0
  %128 = vmatpush1.msra.mxu0 %v43
  %129 = vmatprep.subr.mxu0 0.0
  %130 = vmatpush1.msra.mxu0 %v44
  %131 = vmatprep.subr.mxu0 0.0
  %132 = vmatpush1.msra.mxu0 %v45
  %133 = vmatprep.subr.mxu0 0.0
  %134 = vmatpush1.msra.mxu0 %v46
  %135 = vmatprep.subr.mxu0 0.0
  %136 = vmatpush1.msra.mxu0 %v47
  %137 = vmatprep.subr.mxu0 0.0
  %138 = vmatpush1.msra.mxu0 %v48
  %139 = vmatprep.subr.mxu0 0.0
  %140 = vmatpush1.msra.mxu0 %v49
  %141 = vmatprep.subr.mxu0 0.0
  %142 = vmatpush1.msra.mxu0 %v50
  %143 = vmatprep.subr.mxu0 0.0
  %144 = vmatpush1.msra.mxu0 %v51
  %145 = vmatprep.subr.mxu0 0.0
  %146 = vmatpush1.msra.mxu0 %v52
  %147 = vmatprep.subr.mxu0 0.0
  %148 = vmatpush1.msra.mxu0 %v53
  %149 = vmatprep.subr.mxu0 0.0
  %150 = vmatpush1.msra.mxu0 %v54
  %151 = vmatprep.subr.mxu0 0.0
  %152 = vmatpush1.msra.mxu0 %v55
  %153 = vmatprep.subr.mxu0 0.0
  %154 = vmatpush1.msra.mxu0 %v56
  %155 = vmatprep.subr.mxu0 0.0
  %156 = vmatpush1.msra.mxu0 %v57
  %157 = vmatprep.subr.mxu0 0.0
  %158 = vmatpush1.msra.mxu0 %v58
  %159 = vmatprep.subr.mxu0 0.0
  %160 = vmatpush1.msra.mxu0 %v59
  %161 = vmatprep.subr.mxu0 0.0
  %162 = vmatpush1.msra.mxu0 %v60
  %163 = vmatprep.subr.mxu0 0.0
  %164 = vmatpush1.msra.mxu0 %v61
  %165 = vmatprep.mubr.f32.mxu0 %v27
  %166 = vmatmul.mubr.f32.gmra.mrb[0].mxu0 %v26
  %v167 = vpop.f32.mrb[0].mxu0
  %v168 = vadd.f32 %v99, %v167
  %v169 = vpop.f32.mrb[0].mxu0
  %170 = vdwg.mxu0
  %171 = vmatprep.subr.mxu0 0.0
  %172 = vmatpush1.msra.mxu0 %v62
  %173 = vmatprep.subr.mxu0 0.0
  %174 = vmatpush1.msra.mxu0 %v63
  %175 = vmatprep.subr.mxu0 0.0
  %176 = vmatpush1.msra.mxu0 %v64
  %177 = vmatprep.subr.mxu0 0.0
  %178 = vmatpush1.msra.mxu0 %v65
  %179 = vmatprep.subr.mxu0 0.0
  %180 = vmatpush1.msra.mxu0 %v66
  %181 = vmatprep.subr.mxu0 0.0
  %182 = vmatpush1.msra.mxu0 %v67
  %183 = vmatprep.subr.mxu0 0.0
  %184 = vmatpush1.msra.mxu0 %v68
  %185 = vmatprep.subr.mxu0 0.0
  %186 = vmatpush1.msra.mxu0 %v69
  %187 = vmatprep.subr.mxu0 0.0
  %188 = vmatpush1.msra.mxu0 %v70
  %189 = vmatprep.subr.mxu0 0.0
  %190 = vmatpush1.msra.mxu0 %v71
  %191 = vmatprep.subr.mxu0 0.0
  %192 = vmatpush1.msra.mxu0 %v72
  %193 = vmatprep.subr.mxu0 0.0
  %194 = vmatpush1.msra.mxu0 %v73
  %195 = vmatprep.subr.mxu0 0.0
  %196 = vmatpush1.msra.mxu0 %v74
  %197 = vmatprep.subr.mxu0 0.0
  %198 = vmatpush1.msra.mxu0 %v75
  %199 = vmatprep.subr.mxu0 0.0
  %200 = vmatpush1.msra.mxu0 %v76
  %201 = vmatprep.subr.mxu0 0.0
  %202 = vmatpush1.msra.mxu0 %v77
  %203 = vmatprep.subr.mxu0 0.0
  %204 = vmatpush1.msra.mxu0 %v78
  %205 = vmatprep.subr.mxu0 0.0
  %206 = vmatpush1.msra.mxu0 %v79
  %207 = vmatprep.subr.mxu0 0.0
  %208 = vmatpush1.msra.mxu0 %v80
  %209 = vmatprep.subr.mxu0 0.0
  %210 = vmatpush1.msra.mxu0 %v81
  %211 = vmatprep.subr.mxu0 0.0
  %212 = vmatpush1.msra.mxu0 %v82
  %213 = vmatprep.subr.mxu0 0.0
  %214 = vmatpush1.msra.mxu0 %v83
  %215 = vmatprep.subr.mxu0 0.0
  %216 = vmatpush1.msra.mxu0 %v84
  %217 = vmatprep.subr.mxu0 0.0
  %218 = vmatpush1.msra.mxu0 %v85
  %219 = vmatprep.subr.mxu0 0.0
  %220 = vmatpush1.msra.mxu0 %v86
  %221 = vmatprep.subr.mxu0 0.0
  %222 = vmatpush1.msra.mxu0 %v87
  %223 = vmatprep.subr.mxu0 0.0
  %224 = vmatpush1.msra.mxu0 %v88
  %225 = vmatprep.subr.mxu0 0.0
  %226 = vmatpush1.msra.mxu0 %v89
  %227 = vmatprep.subr.mxu0 0.0
  %228 = vmatpush1.msra.mxu0 %v90
  %229 = vmatprep.subr.mxu0 0.0
  %230 = vmatpush1.msra.mxu0 %v91
  %231 = vmatprep.subr.mxu0 0.0
  %232 = vmatpush1.msra.mxu0 %v92
  %233 = vmatprep.subr.mxu0 0.0
  %234 = vmatpush1.msra.mxu0 %v93
  %235 = vmatprep.mubr.f32.mxu0 %v29
  %236 = vmatmul.mubr.f32.gmra.mrb[0].mxu0 %v28
  %v237 = vpop.f32.mrb[0].mxu0
  %v238 = vadd.f32 %v168, %v237
  %v239 = vpop.f32.mrb[0].mxu0
  %240 = vdwg.mxu0
  %v241 = vmax.f32 %v238, 0.0
  %v242 = vld [vmem:[%s3] sm:$0xff]
  %v243 = vld [vmem:[%s3 + $0x8] sm:$0xff]
  %v244 = vld [vmem:[%s3 + $0x10] sm:$0xff]
  %v245 = vld [vmem:[%s3 + $0x18] sm:$0xff]
  %v246 = vld [vmem:[%s3 + $0x20] sm:$0xff]
  %v247 = vld [vmem:[%s3 + $0x28] sm:$0xff]
  %v248 = vld [vmem:[%s3 + $0x30] sm:$0xff]
  %v249 = vld [vmem:[%s3 + $0x38] sm:$0xff]
  %v250 = vld [vmem:[%s3 + $0x40] sm:$0xff]
  %v251 = vld [vmem:[%s3 + $0x48] sm:$0xff]
  %v252 = vld [vmem:[%s3 + $0x50] sm:$0xff]
  %v253 = vld [vmem:[%s3 + $0x58] sm:$0xff]
  %v254 = vld [vmem:[%s3 + $0x60] sm:$0xff]
  %v255 = vld [vmem:[%s3 + $0x68] sm:$0xff]
  %v256 = vld [vmem:[%s3 + $0x70] sm:$0xff]
  %v257 = vld [vmem:[%s3 + $0x78] sm:$0xff]
  %v258 = vld [vmem:[%s4] sm:$0x1]
  %v260 = vlaneseq
  %v261 = vshrl.u32 %v260, 7
  %v262 = vsub.s32 0, %v261
  %v263 = vrot.slane %v258, %v262
  %265 = vmatprep.subr.mxu0 0.0
  %266 = vmatpush1.msra.mxu0 %v242
  %267 = vmatprep.subr.mxu0 0.0
  %268 = vmatpush1.msra.mxu0 %v243
  %269 = vmatprep.subr.mxu0 0.0
  %270 = vmatpush1.msra.mxu0 %v244
  %271 = vmatprep.subr.mxu0 0.0
  %272 = vmatpush1.msra.mxu0 %v245
  %273 = vmatprep.subr.mxu0 0.0
  %274 = vmatpush1.msra.mxu0 %v246
  %275 = vmatprep.subr.mxu0 0.0
  %276 = vmatpush1.msra.mxu0 %v247
  %277 = vmatprep.subr.mxu0 0.0
  %278 = vmatpush1.msra.mxu0 %v248
  %279 = vmatprep.subr.mxu0 0.0
  %280 = vmatpush1.msra.mxu0 %v249
  %281 = vmatprep.subr.mxu0 0.0
  %282 = vmatpush1.msra.mxu0 %v250
  %283 = vmatprep.subr.mxu0 0.0
  %284 = vmatpush1.msra.mxu0 %v251
  %285 = vmatprep.subr.mxu0 0.0
  %286 = vmatpush1.msra.mxu0 %v252
  %287 = vmatprep.subr.mxu0 0.0
  %288 = vmatpush1.msra.mxu0 %v253
  %289 = vmatprep.subr.mxu0 0.0
  %290 = vmatpush1.msra.mxu0 %v254
  %291 = vmatprep.subr.mxu0 0.0
  %292 = vmatpush1.msra.mxu0 %v255
  %293 = vmatprep.subr.mxu0 0.0
  %294 = vmatpush1.msra.mxu0 %v256
  %295 = vmatprep.subr.mxu0 0.0
  %296 = vmatpush1.msra.mxu0 %v257
  %297 = vmatprep.subr.mxu0 0.0
  %298 = vmatpush1.msra.mxu0 0.0
  %299 = vmatprep.subr.mxu0 0.0
  %300 = vmatpush1.msra.mxu0 0.0
  %301 = vmatprep.subr.mxu0 0.0
  %302 = vmatpush1.msra.mxu0 0.0
  %303 = vmatprep.subr.mxu0 0.0
  %304 = vmatpush1.msra.mxu0 0.0
  %305 = vmatprep.subr.mxu0 0.0
  %306 = vmatpush1.msra.mxu0 0.0
  %307 = vmatprep.subr.mxu0 0.0
  %308 = vmatpush1.msra.mxu0 0.0
  %309 = vmatprep.subr.mxu0 0.0
  %310 = vmatpush1.msra.mxu0 0.0
  %311 = vmatprep.subr.mxu0 0.0
  %312 = vmatpush1.msra.mxu0 0.0
  %313 = vmatprep.subr.mxu0 0.0
  %314 = vmatpush1.msra.mxu0 0.0
  %315 = vmatprep.subr.mxu0 0.0
  %316 = vmatpush1.msra.mxu0 0.0
  %317 = vmatprep.subr.mxu0 0.0
  %318 = vmatpush1.msra.mxu0 0.0
  %319 = vmatprep.subr.mxu0 0.0
  %320 = vmatpush1.msra.mxu0 0.0
  %321 = vmatprep.subr.mxu0 0.0
  %322 = vmatpush1.msra.mxu0 0.0
  %323 = vmatprep.subr.mxu0 0.0
  %324 = vmatpush1.msra.mxu0 0.0
  %325 = vmatprep.subr.mxu0 0.0
  %326 = vmatpush1.msra.mxu0 0.0
  %327 = vmatprep.subr.mxu0 0.0
  %328 = vmatpush1.msra.mxu0 0.0
  %329 = vmatprep.mubr.f32.mxu0 0.0
  %330 = vmatmul.mubr.f32.gmra.mrb[0].mxu0 %v241
  %v331 = vpop.f32.mrb[0].mxu0
  %v332 = vadd.f32 %v263, %v331
  %v333 = vpop.f32.mrb[0].mxu0
  %334 = vdwg.mxu0
  %v335 = vmax.f32 %v332, 0.0
  %v336 = vld [vmem:[%s5] sm:$0xff]
  %v337 = vld [vmem:[%s5 + $0x8] sm:$0xff]
  %v338 = vld [vmem:[%s5 + $0x10] sm:$0xff]
  %v339 = vld [vmem:[%s5 + $0x18] sm:$0xff]
  %v340 = vld [vmem:[%s5 + $0x20] sm:$0xff]
  %v341 = vld [vmem:[%s5 + $0x28] sm:$0xff]
  %v342 = vld [vmem:[%s5 + $0x30] sm:$0xff]
  %v343 = vld [vmem:[%s5 + $0x38] sm:$0xff]
  %v344 = vld [vmem:[%s5 + $0x40] sm:$0xff]
  %v345 = vld [vmem:[%s5 + $0x48] sm:$0xff]
  %v346 = vld [vmem:[%s5 + $0x50] sm:$0xff]
  %v347 = vld [vmem:[%s5 + $0x58] sm:$0xff]
  %v348 = vld [vmem:[%s5 + $0x60] sm:$0xff]
  %v349 = vld [vmem:[%s5 + $0x68] sm:$0xff]
  %v350 = vld [vmem:[%s5 + $0x70] sm:$0xff]
  %v351 = vld [vmem:[%s5 + $0x78] sm:$0xff]
  %v352 = vld [vmem:[%s6] sm:$0x1]
  %v354 = vlaneseq
  %v355 = vshrl.u32 %v354, 7
  %v356 = vsub.s32 0, %v355
  %v357 = vrot.slane %v352, %v356
  %359 = vmatprep.subr.mxu0 0.0
  %360 = vmatpush1.msra.mxu0 %v336
  %361 = vmatprep.subr.mxu0 0.0
  %362 = vmatpush1.msra.mxu0 %v337
  %363 = vmatprep.subr.mxu0 0.0
  %364 = vmatpush1.msra.mxu0 %v338
  %365 = vmatprep.subr.mxu0 0.0
  %366 = vmatpush1.msra.mxu0 %v339
  %367 = vmatprep.subr.mxu0 0.0
  %368 = vmatpush1.msra.mxu0 %v340
  %369 = vmatprep.subr.mxu0 0.0
  %370 = vmatpush1.msra.mxu0 %v341
  %371 = vmatprep.subr.mxu0 0.0
  %372 = vmatpush1.msra.mxu0 %v342
  %373 = vmatprep.subr.mxu0 0.0
  %374 = vmatpush1.msra.mxu0 %v343
  %375 = vmatprep.subr.mxu0 0.0
  %376 = vmatpush1.msra.mxu0 %v344
  %377 = vmatprep.subr.mxu0 0.0
  %378 = vmatpush1.msra.mxu0 %v345
  %379 = vmatprep.subr.mxu0 0.0
  %380 = vmatpush1.msra.mxu0 %v346
  %381 = vmatprep.subr.mxu0 0.0
  %382 = vmatpush1.msra.mxu0 %v347
  %383 = vmatprep.subr.mxu0 0.0
  %384 = vmatpush1.msra.mxu0 %v348
  %385 = vmatprep.subr.mxu0 0.0
  %386 = vmatpush1.msra.mxu0 %v349
  %387 = vmatprep.subr.mxu0 0.0
  %388 = vmatpush1.msra.mxu0 %v350
  %389 = vmatprep.subr.mxu0 0.0
  %390 = vmatpush1.msra.mxu0 %v351
  %391 = vmatprep.subr.mxu0 0.0
  %392 = vmatpush1.msra.mxu0 0.0
  %393 = vmatprep.subr.mxu0 0.0
  %394 = vmatpush1.msra.mxu0 0.0
  %395 = vmatprep.subr.mxu0 0.0
  %396 = vmatpush1.msra.mxu0 0.0
  %397 = vmatprep.subr.mxu0 0.0
  %398 = vmatpush1.msra.mxu0 0.0
  %399 = vmatprep.subr.mxu0 0.0
  %400 = vmatpush1.msra.mxu0 0.0
  %401 = vmatprep.subr.mxu0 0.0
  %402 = vmatpush1.msra.mxu0 0.0
  %403 = vmatprep.subr.mxu0 0.0
  %404 = vmatpush1.msra.mxu0 0.0
  %405 = vmatprep.subr.mxu0 0.0
  %406 = vmatpush1.msra.mxu0 0.0
  %407 = vmatprep.subr.mxu0 0.0
  %408 = vmatpush1.msra.mxu0 0.0
  %409 = vmatprep.subr.mxu0 0.0
  %410 = vmatpush1.msra.mxu0 0.0
  %411 = vmatprep.subr.mxu0 0.0
  %412 = vmatpush1.msra.mxu0 0.0
  %413 = vmatprep.subr.mxu0 0.0
  %414 = vmatpush1.msra.mxu0 0.0
  %415 = vmatprep.subr.mxu0 0.0
  %416 = vmatpush1.msra.mxu0 0.0
  %417 = vmatprep.subr.mxu0 0.0
  %418 = vmatpush1.msra.mxu0 0.0
  %419 = vmatprep.subr.mxu0 0.0
  %420 = vmatpush1.msra.mxu0 0.0
  %421 = vmatprep.subr.mxu0 0.0
  %422 = vmatpush1.msra.mxu0 0.0
  %423 = vmatprep.mubr.f32.mxu0 0.0
  %424 = vmatmul.mubr.f32.gmra.mrb[0].mxu0 %v335
  %v425 = vpop.f32.mrb[0].mxu0
  %v426 = vadd.f32 %v357, %v425
  %v427 = vpop.f32.mrb[0].mxu0
  %428 = vdwg.mxu0
  %429 = vst [vmem:[%s7] sm:$0xff] %v426
  // Predicated region
  $region30: #{lenet_forward.5} parent=0 // pred_check
    _
  $region31: #{lenet_forward.5} parent=0 // pred_check_branch
    %431 = sbr.rel (0) target = $region33
  $region32: #{lenet_forward.5} parent=0 // pred_region
    _
  $region33: #{lenet_forward.5} parent=0 // pred_fallthru
    _
  // Predicated region
  $region34: #{lenet_forward.5} parent=0 // pred_check
    _
  $region35: #{lenet_forward.5} parent=0 // pred_check_branch
    %433 = sbr.rel (0) target = $region37
  $region36: #{lenet_forward.5} parent=0 // pred_region
    _
  $region37: #{lenet_forward.5} parent=0 // pred_fallthru
    _

</llo_original>
